<compile_context>
chip_gen: v6e
topology: v6e:2x2x1
jax: 0.10.0
libtpu: 0.0.40
codegen_flags: <defaults>
</compile_context>

<pallas_src>
import math

import jax
import jax.numpy as jnp
from jax import lax
from jax.experimental import pallas as pl
from jax.experimental.pallas import tpu as pltpu

_MAX_TILE = 2048  # ~8 MiB of f32 activations at this tile; far below VMEM limits.


def _mlp_kernel(x_ref,
                w1_ref, b1_ref,
                w2_ref, b2_ref,
                w3_ref, b3_ref,
                w4_ref, b4_ref,
                o_ref):
    # Layers 1-3: bf16 MXU matmuls with f32 accumulation; bias + ReLU in f32.
    x = x_ref[...].astype(jnp.bfloat16)

    h = jnp.dot(x, w1_ref[...], preferred_element_type=jnp.float32) + b1_ref[...]
    h = jnp.maximum(h, 0.0)

    h = jnp.dot(h.astype(jnp.bfloat16), w2_ref[...],
                preferred_element_type=jnp.float32) + b2_ref[...]
    h = jnp.maximum(h, 0.0)

    h = jnp.dot(h.astype(jnp.bfloat16), w3_ref[...],
                preferred_element_type=jnp.float32) + b3_ref[...]
    h = jnp.maximum(h, 0.0)                       # [tile, 128], f32

    # Layer 4 (out_features=1): keep it on the MXU and land lane-dense.
    # dot_general contracting (1,) vs (1,): (1,128) x (tile,128) -> (1,tile),
    # i.e. M=1, K=128, N=tile -- no XLU reduce, no sublane->lane relayout.
    logits = lax.dot_general(
        w4_ref[...], h.astype(jnp.bfloat16),
        dimension_numbers=(((1,), (1,)), ((), ())),
        preferred_element_type=jnp.float32)       # [1, tile]
    logits = logits + b4_ref[...]                 # b4 is (1, 1), broadcasts

    # Numerically stable sigmoid:
    #   e = exp(-|x|) in (0, 1];  r = 1/(1+e) in [0.5, 1)  (approx recip safe)
    #   sigma(x) = r for x >= 0, e*r for x < 0.
    e = jnp.exp(-jnp.abs(logits))                 # EUP
    r = pl.reciprocal(1.0 + e, approx=True)       # EUP, argument in [1, 2]
    probs = jnp.where(logits >= 0, r, e * r)

    o_ref[...] = probs.astype(o_ref.dtype)        # full-width (1, tile) store


def _round_up(v, m):
    return ((v + m - 1) // m) * m


def _num_tensorcores():
    # v7x has 2 TensorCores per chip sharing the "parallel" grid axis;
    # v5e/v6e have 1. Default conservatively to 1 if detection fails.
    try:
        kind = jax.devices()[0].device_kind.lower()
        if "v7" in kind:
            return 2
    except Exception:
        pass
    return 1


def _choose_tiling(B, num_cores):
    """Return (batch_tile, n_tiles)."""
    # Fewest steps that respect the max tile size...
    n = max(1, math.ceil(B / _MAX_TILE))
    # ...and an even step count on 2-TC chips so both cores stay busy.
    if num_cores >= 2 and B >= 256 and (n % 2 == 1):
        n += 1 if n > 1 else 1      # 1 -> 2, 3 -> 4, ...
    tile = _round_up(math.ceil(B / n), 128)
    tile = max(128, min(tile, _MAX_TILE))
    n_tiles = math.ceil(B / tile)
    return tile, n_tiles


def distinguish_model_forward(x, params, *, batch_tile=None):
    """x: [B, 64] float32 -> [B, 1] float32 (sigmoid probabilities)."""
    (w1, b1), (w2, b2), (w3, b3), (w4, b4) = params
    B, F = x.shape
    assert F == 64

    if batch_tile is None:
        batch_tile, n_tiles = _choose_tiling(B, _num_tensorcores())
    else:
        n_tiles = pl.cdiv(B, batch_tile)

    Bp = n_tiles * batch_tile
    if Bp != B:
        x = jnp.pad(x, ((0, Bp - B), (0, 0)))     # padded rows sliced off below

    # bf16 operands for all four MXU matmuls (halves weight DMA traffic too).
    w1b = w1.astype(jnp.bfloat16)
    w2b = w2.astype(jnp.bfloat16)
    w3b = w3.astype(jnp.bfloat16)
    w4_row = w4.reshape(1, -1).astype(jnp.bfloat16)   # (128, 1) -> (1, 128)

    def full2d(arr):
        # Grid-invariant block (constant index_map) -> stays resident in VMEM.
        return pl.BlockSpec(arr.shape, lambda i: (0, 0))

    out = pl.pallas_call(
        _mlp_kernel,
        out_shape=jax.ShapeDtypeStruct((n_tiles, batch_tile), jnp.float32),
        grid=(n_tiles,),
        in_specs=[
            pl.BlockSpec((batch_tile, 64), lambda i: (i, 0)),
            full2d(w1b), full2d(b1),
            full2d(w2b), full2d(b2),
            full2d(w3b), full2d(b3),
            full2d(w4_row), full2d(b4),
        ],
        out_specs=pl.BlockSpec((1, batch_tile), lambda i: (i, 0)),
        compiler_params=pltpu.CompilerParams(
            dimension_semantics=("parallel",)),
    )(x, w1b, b1, w2b, b2, w3b, b3, w4_row, b4)

    return out.reshape(Bp, 1)[:B]


def init_params(key):
    """Deterministic init matching nn.Linear's default:
    W, b ~ U(-1/sqrt(fan_in), 1/sqrt(fan_in)); stored as [in, out] / [1, out]."""
    dims = [(64, 512), (512, 256), (256, 128), (128, 1)]
    params = []
    for (fan_in, fan_out) in dims:
        key, kw, kb = jax.random.split(key, 3)
        bound = 1.0 / math.sqrt(fan_in)
        w = jax.random.uniform(kw, (fan_in, fan_out), jnp.float32, -bound, bound)
        b = jax.random.uniform(kb, (1, fan_out), jnp.float32, -bound, bound)
        params.append((w, b))
    return params


def reference_forward(x, params):
    h = x
    for i, (w, b) in enumerate(params):
        h = h @ w + b
        if i < 3:
            h = jnp.maximum(h, 0.0)
    return jax.nn.sigmoid(h)


if __name__ == "__main__":
    key = jax.random.PRNGKey(0)
    key, kx1, kx2 = jax.random.split(key, 3)
    params = init_params(key)

    # Case 1: batch not a multiple of the tile -> exercises padding path
    # (1 tile of 384 on single-TC chips, 2 tiles of 256 on v7x).
    B1 = 300
    x1 = jax.random.normal(kx1, (B1, 64), jnp.float32)
    out1 = jax.block_until_ready(distinguish_model_forward(x1, params))
    ref1 = reference_forward(x1, params)
    assert out1.shape == (B1, 1)
    err1 = float(jnp.max(jnp.abs(out1 - ref1)))
    # bf16 matmul operands + approximate reciprocal -> small tolerance vs f32.
    assert err1 < 2e-2, err1

    # Case 2: tiny batch (padded up to one 128-row tile).
    # TODO(synk): optional sub-128 masked-store path for latency-critical tiny B.
    B2 = 8
    x2 = jax.random.normal(kx2, (B2, 64), jnp.float32)
    out2 = jax.block_until_ready(distinguish_model_forward(x2, params))
    ref2 = reference_forward(x2, params)
    assert out2.shape == (B2, 1)
    err2 = float(jnp.max(jnp.abs(out2 - ref2)))
    assert err2 < 2e-2, err2

    print("KERNEL_OK")
</pallas_src>

<mosaic_0001>
module attributes {stable_mosaic.version = 11 : i64} {
  func.func @_mlp_kernel(%arg0: i32, %arg1: memref<384x64xf32, #tpu.memory_space<vmem>>, %arg2: memref<64x512xbf16, #tpu.memory_space<vmem>>, %arg3: memref<1x512xf32, #tpu.memory_space<vmem>>, %arg4: memref<512x256xbf16, #tpu.memory_space<vmem>>, %arg5: memref<1x256xf32, #tpu.memory_space<vmem>>, %arg6: memref<256x128xbf16, #tpu.memory_space<vmem>>, %arg7: memref<1x128xf32, #tpu.memory_space<vmem>>, %arg8: memref<1x128xbf16, #tpu.memory_space<vmem>>, %arg9: memref<1x1xf32, #tpu.memory_space<vmem>>, %arg10: memref<1x384xf32, #tpu.memory_space<vmem>>) attributes {dimension_semantics = [#tpu.dimension_semantics<parallel>], iteration_bounds = array<i64: 1>, scalar_prefetch = 0 : i64, scratch_operands = 0 : i64, tpu.core_type = #tpu.core_type<tc>, window_params = [{transform_indices = @transform_0, window_bounds = array<i64: 384, 64>}, {pipeline_mode = #tpu.pipeline_mode<synchronous>, transform_indices = @transform_1, window_bounds = array<i64: 64, 512>}, {pipeline_mode = #tpu.pipeline_mode<synchronous>, transform_indices = @transform_2, window_bounds = array<i64: 1, 512>}, {pipeline_mode = #tpu.pipeline_mode<synchronous>, transform_indices = @transform_3, window_bounds = array<i64: 512, 256>}, {pipeline_mode = #tpu.pipeline_mode<synchronous>, transform_indices = @transform_4, window_bounds = array<i64: 1, 256>}, {pipeline_mode = #tpu.pipeline_mode<synchronous>, transform_indices = @transform_5, window_bounds = array<i64: 256, 128>}, {pipeline_mode = #tpu.pipeline_mode<synchronous>, transform_indices = @transform_6, window_bounds = array<i64: 1, 128>}, {pipeline_mode = #tpu.pipeline_mode<synchronous>, transform_indices = @transform_7, window_bounds = array<i64: 1, 128>}, {pipeline_mode = #tpu.pipeline_mode<synchronous>, transform_indices = @transform_8, window_bounds = array<i64: 1, 1>}, {transform_indices = @transform_9, window_bounds = array<i64: 1, 384>}]} {
    %c0 = arith.constant 0 : index
    %c0_0 = arith.constant 0 : index
    %0 = vector.load %arg1[%c0, %c0_0] : memref<384x64xf32, #tpu.memory_space<vmem>>, vector<384x64xf32>
    %1 = arith.truncf %0 : vector<384x64xf32> to vector<384x64xbf16>
    %c0_1 = arith.constant 0 : index
    %c0_2 = arith.constant 0 : index
    %2 = vector.load %arg2[%c0_1, %c0_2] : memref<64x512xbf16, #tpu.memory_space<vmem>>, vector<64x512xbf16>
    %cst = arith.constant dense<0.000000e+00> : vector<384x512xf32>
    %3 = tpu.matmul %1, %2, %cst {dimension_numbers = #tpu.dot_dimension_numbers<[1], [0], [0], [1], [0, 0, 1, 1], [], []>} : vector<384x64xbf16>, vector<64x512xbf16>, vector<384x512xf32> -> vector<384x512xf32>
    %c0_3 = arith.constant 0 : index
    %c0_4 = arith.constant 0 : index
    %4 = vector.load %arg3[%c0_3, %c0_4] : memref<1x512xf32, #tpu.memory_space<vmem>>, vector<1x512xf32>
    %5 = vector.broadcast %4 : vector<1x512xf32> to vector<384x512xf32>
    %6 = arith.addf %3, %5 : vector<384x512xf32>
    %cst_5 = arith.constant 0.000000e+00 : f32
    %7 = vector.broadcast %cst_5 : f32 to vector<384x512xf32>
    %8 = arith.maximumf %6, %7 : vector<384x512xf32>
    %9 = arith.truncf %8 : vector<384x512xf32> to vector<384x512xbf16>
    %c0_6 = arith.constant 0 : index
    %c0_7 = arith.constant 0 : index
    %10 = vector.load %arg4[%c0_6, %c0_7] : memref<512x256xbf16, #tpu.memory_space<vmem>>, vector<512x256xbf16>
    %cst_8 = arith.constant dense<0.000000e+00> : vector<384x256xf32>
    %11 = tpu.matmul %9, %10, %cst_8 {dimension_numbers = #tpu.dot_dimension_numbers<[1], [0], [0], [1], [0, 0, 1, 1], [], []>} : vector<384x512xbf16>, vector<512x256xbf16>, vector<384x256xf32> -> vector<384x256xf32>
    %c0_9 = arith.constant 0 : index
    %c0_10 = arith.constant 0 : index
    %12 = vector.load %arg5[%c0_9, %c0_10] : memref<1x256xf32, #tpu.memory_space<vmem>>, vector<1x256xf32>
    %13 = vector.broadcast %12 : vector<1x256xf32> to vector<384x256xf32>
    %14 = arith.addf %11, %13 : vector<384x256xf32>
    %cst_11 = arith.constant 0.000000e+00 : f32
    %15 = vector.broadcast %cst_11 : f32 to vector<384x256xf32>
    %16 = arith.maximumf %14, %15 : vector<384x256xf32>
    %17 = arith.truncf %16 : vector<384x256xf32> to vector<384x256xbf16>
    %c0_12 = arith.constant 0 : index
    %c0_13 = arith.constant 0 : index
    %18 = vector.load %arg6[%c0_12, %c0_13] : memref<256x128xbf16, #tpu.memory_space<vmem>>, vector<256x128xbf16>
    %cst_14 = arith.constant dense<0.000000e+00> : vector<384x128xf32>
    %19 = tpu.matmul %17, %18, %cst_14 {dimension_numbers = #tpu.dot_dimension_numbers<[1], [0], [0], [1], [0, 0, 1, 1], [], []>} : vector<384x256xbf16>, vector<256x128xbf16>, vector<384x128xf32> -> vector<384x128xf32>
    %c0_15 = arith.constant 0 : index
    %c0_16 = arith.constant 0 : index
    %20 = vector.load %arg7[%c0_15, %c0_16] : memref<1x128xf32, #tpu.memory_space<vmem>>, vector<1x128xf32>
    %21 = vector.broadcast %20 : vector<1x128xf32> to vector<384x128xf32>
    %22 = arith.addf %19, %21 : vector<384x128xf32>
    %cst_17 = arith.constant 0.000000e+00 : f32
    %23 = vector.broadcast %cst_17 : f32 to vector<384x128xf32>
    %24 = arith.maximumf %22, %23 : vector<384x128xf32>
    %c0_18 = arith.constant 0 : index
    %c0_19 = arith.constant 0 : index
    %25 = vector.load %arg8[%c0_18, %c0_19] : memref<1x128xbf16, #tpu.memory_space<vmem>>, vector<1x128xbf16>
    %26 = arith.truncf %24 : vector<384x128xf32> to vector<384x128xbf16>
    %cst_20 = arith.constant dense<0.000000e+00> : vector<1x384xf32>
    %27 = tpu.matmul %25, %26, %cst_20 {dimension_numbers = #tpu.dot_dimension_numbers<[1], [1], [0], [0], [0, 0, 1, 0], [], []>} : vector<1x128xbf16>, vector<384x128xbf16>, vector<1x384xf32> -> vector<1x384xf32>
    %c0_21 = arith.constant 0 : index
    %c0_22 = arith.constant 0 : index
    %28 = vector.load %arg9[%c0_21, %c0_22] : memref<1x1xf32, #tpu.memory_space<vmem>>, vector<1x1xf32>
    %29 = vector.broadcast %28 : vector<1x1xf32> to vector<1x384xf32>
    %30 = arith.addf %27, %29 : vector<1x384xf32>
    %31 = math.absf %30 : vector<1x384xf32>
    %cst_23 = arith.constant 0.000000e+00 : f32
    %32 = vector.broadcast %cst_23 : f32 to vector<1x384xf32>
    %33 = arith.subf %32, %31 : vector<1x384xf32>
    %34 = math.exp %33 : vector<1x384xf32>
    %cst_24 = arith.constant 1.000000e+00 : f32
    %35 = vector.broadcast %cst_24 : f32 to vector<1x384xf32>
    %36 = arith.addf %35, %34 : vector<1x384xf32>
    %37 = tpu.reciprocal %36 {approx = true} : vector<1x384xf32> -> vector<1x384xf32>
    %cst_25 = arith.constant 0.000000e+00 : f32
    %38 = vector.broadcast %cst_25 : f32 to vector<1x384xf32>
    %39 = arith.cmpf oge, %30, %38 : vector<1x384xf32>
    %40 = arith.mulf %34, %37 : vector<1x384xf32>
    %41 = arith.select %39, %37, %40 : vector<1x384xi1>, vector<1x384xf32>
    %c0_26 = arith.constant 0 : index
    %c0_27 = arith.constant 0 : index
    %42 = vector.load %arg10[%c0_26, %c0_27] : memref<1x384xf32, #tpu.memory_space<vmem>>, vector<1x384xf32>
    tpu.vector_store %arg10[%c0_26, %c0_27], %41 {strides = array<i32>} : memref<1x384xf32, #tpu.memory_space<vmem>>, vector<1x384xf32>,
    return
  }
  func.func @transform_0(%arg0: i32) -> (i32, i32) {
    %c0_i32 = arith.constant 0 : i32
    %c0_i32_0 = arith.constant 0 : i32
    return %arg0, %c0_i32 : i32, i32
  }
  func.func @transform_1(%arg0: i32) -> (i32, i32) {
    %c0_i32 = arith.constant 0 : i32
    %c0_i32_0 = arith.constant 0 : i32
    %c0_i32_1 = arith.constant 0 : i32
    return %c0_i32, %c0_i32_0 : i32, i32
  }
  func.func @transform_2(%arg0: i32) -> (i32, i32) {
    %c0_i32 = arith.constant 0 : i32
    %c0_i32_0 = arith.constant 0 : i32
    %c0_i32_1 = arith.constant 0 : i32
    return %c0_i32, %c0_i32_0 : i32, i32
  }
  func.func @transform_3(%arg0: i32) -> (i32, i32) {
    %c0_i32 = arith.constant 0 : i32
    %c0_i32_0 = arith.constant 0 : i32
    %c0_i32_1 = arith.constant 0 : i32
    return %c0_i32, %c0_i32_0 : i32, i32
  }
  func.func @transform_4(%arg0: i32) -> (i32, i32) {
    %c0_i32 = arith.constant 0 : i32
    %c0_i32_0 = arith.constant 0 : i32
    %c0_i32_1 = arith.constant 0 : i32
    return %c0_i32, %c0_i32_0 : i32, i32
  }
  func.func @transform_5(%arg0: i32) -> (i32, i32) {
    %c0_i32 = arith.constant 0 : i32
    %c0_i32_0 = arith.constant 0 : i32
    %c0_i32_1 = arith.constant 0 : i32
    return %c0_i32, %c0_i32_0 : i32, i32
  }
  func.func @transform_6(%arg0: i32) -> (i32, i32) {
    %c0_i32 = arith.constant 0 : i32
    %c0_i32_0 = arith.constant 0 : i32
    %c0_i32_1 = arith.constant 0 : i32
    return %c0_i32, %c0_i32_0 : i32, i32
  }
  func.func @transform_7(%arg0: i32) -> (i32, i32) {
    %c0_i32 = arith.constant 0 : i32
    %c0_i32_0 = arith.constant 0 : i32
    %c0_i32_1 = arith.constant 0 : i32
    return %c0_i32, %c0_i32_0 : i32, i32
  }
  func.func @transform_8(%arg0: i32) -> (i32, i32) {
    %c0_i32 = arith.constant 0 : i32
    %c0_i32_0 = arith.constant 0 : i32
    %c0_i32_1 = arith.constant 0 : i32
    return %c0_i32, %c0_i32_0 : i32, i32
  }
  func.func @transform_9(%arg0: i32) -> (i32, i32) {
    %c0_i32 = arith.constant 0 : i32
    %c0_i32_0 = arith.constant 0 : i32
    return %arg0, %c0_i32 : i32, i32
  }
}

</mosaic_0001>

<llo_original>
// kernel: tpu_custom_call.1
$region0: #{tpu_custom_call.1}
  #allocation0 [shape = 'u32[]', space=smem, size = 0x4, offset = 0x4, fixed_abs, tag = 'smem constant byte address 0x4 - core index']
  #allocation1 [shape = 'u32[144,128]{1,0:T(1,128)}', space=vmem, size = 0x12000, scoped, tag = 'internal scratch']
  #allocation2 [shape = 'f32[1,1]{1,0:T(1,128)S(1)}', space=vmem, size = 0x200, scoped, tag = 'scoped memory for tpu_custom_call.1']
  %s0 = inlined_call_operand.vmem [shape: f32[384,64], index: 0, kind: input, shape index: {}]
  %s1 = inlined_call_operand.hbm [shape: bf16[64,512], index: 1, kind: input, shape index: {}]
  %s2 = inlined_call_operand.vmem [shape: f32[1,512], index: 2, kind: input, shape index: {}]
  %s3 = inlined_call_operand.vmem [shape: bf16[512,256], index: 3, kind: input, shape index: {}]
  %s4 = inlined_call_operand.vmem [shape: f32[1,256], index: 4, kind: input, shape index: {}]
  %s5 = inlined_call_operand.hbm [shape: bf16[256,128], index: 5, kind: input, shape index: {}]
  %s6 = inlined_call_operand.vmem [shape: f32[1,128], index: 6, kind: input, shape index: {}]
  %s7 = inlined_call_operand.vmem [shape: bf16[1,128], index: 7, kind: input, shape index: {}]
  %s8 = inlined_call_operand.<no memory space> [shape: f32[1,1], index: 8, kind: input, shape index: {}]
  %s9 = inlined_call_operand.hbm [shape: f32[1,384], index: 9, kind: output, shape index: {}]
  %s10 = sld [smem:[#allocation0]]
  $region54: #{tpu_custom_call.1} parent=0
    _
  %s12 = ssub.s32 1, %s10
  %s13 = scalar_select 0, %s12, %s10
  %v14 = vstv %s8
  %15 = vst [vmem:[#allocation2] sm:$0x1] %v14
  $region1: #{tpu_custom_call.1} parent=0
    #allocation3 [shape = 'u8[65536]{0}', space=vmem, size = 0x10000, scoped, tag = 'input window, operand 1, single buffered']
    #allocation4 [shape = 's32[1]{0}', space=sflag, size = 0x4, scoped, tag = 'scoped memory for tpu_custom_call.1']
    #allocation5 [shape = 's32[1]{0}', space=sflag, size = 0x4, scoped, tag = 'scoped memory for tpu_custom_call.1']
    #allocation6 [shape = 'u8[65536]{0}', space=vmem, size = 0x10000, scoped, tag = 'input window, operand 5, single buffered']
    #allocation7 [shape = 's32[1]{0}', space=sflag, size = 0x4, scoped, tag = 'scoped memory for tpu_custom_call.1']
    #allocation8 [shape = 'u8[1536]{0}', space=vmem, size = 0x800, scoped, tag = 'output window, operand 0, single buffered']
    %16 = vsyncpa [#allocation4], 0
    %17 = vsyncpa [#allocation7], 0
    %18 = vsyncpa [#allocation5], 0
    // Predicated region
    $region2: #{tpu_custom_call.1} parent=1 // pred_check
      _
    $region3: #{tpu_custom_call.1} parent=1 // pred_check_branch
      %20 = sbr.rel (0) target = $region5
    $region4: #{tpu_custom_call.1} parent=1 // pred_region
      _
    $region5: #{tpu_custom_call.1} parent=1 // pred_fallthru
      _
    // Predicated region
    $region6: #{tpu_custom_call.1} parent=1 // pred_check
      _
    $region7: #{tpu_custom_call.1} parent=1 // pred_check_branch
      %22 = sbr.rel (0) target = $region9
    $region8: #{tpu_custom_call.1} parent=1 // pred_region
      %s24 = ssub.s32 2048, 2048
      %25 = vsyncadd [#allocation4], %s24
      %s26 = sshll.u32 [#allocation3], 4
      %s27 = int_to_ptr.vmem [resolvable:$true] %s26
      %32 = dma.hbm_to_vmem [thread:$0]  %s1, 2048, %s27, [#allocation4], 256, 256, 16
    $region9: #{tpu_custom_call.1} parent=1 // pred_fallthru
      _
    // Predicated region
    $region10: #{tpu_custom_call.1} parent=1 // pred_check
      _
    $region11: #{tpu_custom_call.1} parent=1 // pred_check_branch
      %34 = sbr.rel (0) target = $region13
    $region12: #{tpu_custom_call.1} parent=1 // pred_region
      _
    $region13: #{tpu_custom_call.1} parent=1 // pred_fallthru
      _
    // Predicated region
    $region14: #{tpu_custom_call.1} parent=1 // pred_check
      _
    $region15: #{tpu_custom_call.1} parent=1 // pred_check_branch
      %36 = sbr.rel (0) target = $region17
    $region16: #{tpu_custom_call.1} parent=1 // pred_region
      _
    $region17: #{tpu_custom_call.1} parent=1 // pred_fallthru
      _
    // Predicated region
    $region18: #{tpu_custom_call.1} parent=1 // pred_check
      _
    $region19: #{tpu_custom_call.1} parent=1 // pred_check_branch
      %38 = sbr.rel (0) target = $region21
    $region20: #{tpu_custom_call.1} parent=1 // pred_region
      _
    $region21: #{tpu_custom_call.1} parent=1 // pred_fallthru
      _
    // Predicated region
    $region22: #{tpu_custom_call.1} parent=1 // pred_check
      _
    $region23: #{tpu_custom_call.1} parent=1 // pred_check_branch
      %40 = sbr.rel (0) target = $region25
    $region24: #{tpu_custom_call.1} parent=1 // pred_region
      %s42 = ssub.s32 2048, 2048
      %43 = vsyncadd [#allocation7], %s42
      %s44 = sshll.u32 [#allocation6], 4
      %s45 = int_to_ptr.vmem [resolvable:$true] %s44
      %50 = dma.hbm_to_vmem [thread:$0]  %s5, 2048, %s45, [#allocation7], 64, 64, 4
    $region25: #{tpu_custom_call.1} parent=1 // pred_fallthru
      _
    // Predicated region
    $region26: #{tpu_custom_call.1} parent=1 // pred_check
      _
    $region27: #{tpu_custom_call.1} parent=1 // pred_check_branch
      %52 = sbr.rel (0) target = $region29
    $region28: #{tpu_custom_call.1} parent=1 // pred_region
      _
    $region29: #{tpu_custom_call.1} parent=1 // pred_fallthru
      _
    // Predicated region
    $region30: #{tpu_custom_call.1} parent=1 // pred_check
      _
    $region31: #{tpu_custom_call.1} parent=1 // pred_check_branch
      %54 = sbr.rel (0) target = $region33
    $region32: #{tpu_custom_call.1} parent=1 // pred_region
      _
    $region33: #{tpu_custom_call.1} parent=1 // pred_fallthru
      _
    // Predicated region
    $region34: #{tpu_custom_call.1} parent=1 // pred_check
      _
    $region35: #{tpu_custom_call.1} parent=1 // pred_check_branch
      %56 = sbr.rel (0) target = $region37
    $region36: #{tpu_custom_call.1} parent=1 // pred_region
      _
    $region37: #{tpu_custom_call.1} parent=1 // pred_fallthru
      _
    // Predicated region
    $region38: #{tpu_custom_call.1} parent=1 // pred_check
      _
    $region39: #{tpu_custom_call.1} parent=1 // pred_check_branch
      %58 = sbr.rel (0) target = $region41
    $region40: #{tpu_custom_call.1} parent=1 // pred_region
      %59 = dma.done [#allocation4], 2048
    $region41: #{tpu_custom_call.1} parent=1 // pred_fallthru
      _
    // Predicated region
    $region42: #{tpu_custom_call.1} parent=1 // pred_check
      _
    $region43: #{tpu_custom_call.1} parent=1 // pred_check_branch
      %61 = sbr.rel (0) target = $region45
    $region44: #{tpu_custom_call.1} parent=1 // pred_region
      %62 = dma.done [#allocation7], 2048
    $region45: #{tpu_custom_call.1} parent=1 // pred_fallthru
      _
    %v64 = vld [vmem:[%s0] sm:$0xff]
    %v65 = vld [vmem:[%s0 + $0x8] sm:$0xff]
    %v66 = vld [vmem:[%s0 + $0x10] sm:$0xff]
    %v67 = vld [vmem:[%s0 + $0x18] sm:$0xff]
    %v68 = vld [vmem:[%s0 + $0x20] sm:$0xff]
    %v69 = vld [vmem:[%s0 + $0x28] sm:$0xff]
    %v70 = vld [vmem:[%s0 + $0x30] sm:$0xff]
    %v71 = vld [vmem:[%s0 + $0x38] sm:$0xff]
    %v72 = vld [vmem:[%s0 + $0x40] sm:$0xff]
    %v73 = vld [vmem:[%s0 + $0x48] sm:$0xff]
    %v74 = vld [vmem:[%s0 + $0x50] sm:$0xff]
    %v75 = vld [vmem:[%s0 + $0x58] sm:$0xff]
    %v76 = vld [vmem:[%s0 + $0x60] sm:$0xff]
    %v77 = vld [vmem:[%s0 + $0x68] sm:$0xff]
    %v78 = vld [vmem:[%s0 + $0x70] sm:$0xff]
    %v79 = vld [vmem:[%s0 + $0x78] sm:$0xff]
    %v80 = vld [vmem:[%s0 + $0x80] sm:$0xff]
    %v81 = vld [vmem:[%s0 + $0x88] sm:$0xff]
    %v82 = vld [vmem:[%s0 + $0x90] sm:$0xff]
    %v83 = vld [vmem:[%s0 + $0x98] sm:$0xff]
    %v84 = vld [vmem:[%s0 + $0xa0] sm:$0xff]
    %v85 = vld [vmem:[%s0 + $0xa8] sm:$0xff]
    %v86 = vld [vmem:[%s0 + $0xb0] sm:$0xff]
    %v87 = vld [vmem:[%s0 + $0xb8] sm:$0xff]
    %v88 = vld [vmem:[%s0 + $0xc0] sm:$0xff]
    %v89 = vld [vmem:[%s0 + $0xc8] sm:$0xff]
    %v90 = vld [vmem:[%s0 + $0xd0] sm:$0xff]
    %v91 = vld [vmem:[%s0 + $0xd8] sm:$0xff]
    %v92 = vld [vmem:[%s0 + $0xe0] sm:$0xff]
    %v93 = vld [vmem:[%s0 + $0xe8] sm:$0xff]
    %v94 = vld [vmem:[%s0 + $0xf0] sm:$0xff]
    %v95 = vld [vmem:[%s0 + $0xf8] sm:$0xff]
    %v96 = vld [vmem:[%s0 + $0x100] sm:$0xff]
    %v97 = vld [vmem:[%s0 + $0x108] sm:$0xff]
    %v98 = vld [vmem:[%s0 + $0x110] sm:$0xff]
    %v99 = vld [vmem:[%s0 + $0x118] sm:$0xff]
    %v100 = vld [vmem:[%s0 + $0x120] sm:$0xff]
    %v101 = vld [vmem:[%s0 + $0x128] sm:$0xff]
    %v102 = vld [vmem:[%s0 + $0x130] sm:$0xff]
    %v103 = vld [vmem:[%s0 + $0x138] sm:$0xff]
    %v104 = vld [vmem:[%s0 + $0x140] sm:$0xff]
    %v105 = vld [vmem:[%s0 + $0x148] sm:$0xff]
    %v106 = vld [vmem:[%s0 + $0x150] sm:$0xff]
    %v107 = vld [vmem:[%s0 + $0x158] sm:$0xff]
    %v108 = vld [vmem:[%s0 + $0x160] sm:$0xff]
    %v109 = vld [vmem:[%s0 + $0x168] sm:$0xff]
    %v110 = vld [vmem:[%s0 + $0x170] sm:$0xff]
    %v111 = vld [vmem:[%s0 + $0x178] sm:$0xff]
    %v112 = vpack.c.bf16 %v65, %v64
    %v113 = vpack.c.bf16 %v67, %v66
    %v114 = vpack.c.bf16 %v69, %v68
    %v115 = vpack.c.bf16 %v71, %v70
    %v116 = vpack.c.bf16 %v73, %v72
    %v117 = vpack.c.bf16 %v75, %v74
    %v118 = vpack.c.bf16 %v77, %v76
    %v119 = vpack.c.bf16 %v79, %v78
    %v120 = vpack.c.bf16 %v81, %v80
    %v121 = vpack.c.bf16 %v83, %v82
    %v122 = vpack.c.bf16 %v85, %v84
    %v123 = vpack.c.bf16 %v87, %v86
    %v124 = vpack.c.bf16 %v89, %v88
    %v125 = vpack.c.bf16 %v91, %v90
    %v126 = vpack.c.bf16 %v93, %v92
    %v127 = vpack.c.bf16 %v95, %v94
    %v128 = vpack.c.bf16 %v97, %v96
    %v129 = vpack.c.bf16 %v99, %v98
    %v130 = vpack.c.bf16 %v101, %v100
    %v131 = vpack.c.bf16 %v103, %v102
    %v132 = vpack.c.bf16 %v105, %v104
    %v133 = vpack.c.bf16 %v107, %v106
    %v134 = vpack.c.bf16 %v109, %v108
    %v135 = vpack.c.bf16 %v111, %v110
    %v136 = vld [vmem:[#allocation3] sm:$0xff]
    %v137 = vld [vmem:[#allocation3 + $0x8] sm:$0xff]
    %v138 = vld [vmem:[#allocation3 + $0x10] sm:$0xff]
    %v139 = vld [vmem:[#allocation3 + $0x18] sm:$0xff]
    %v140 = vld [vmem:[#allocation3 + $0x20] sm:$0xff]
    %v141 = vld [vmem:[#allocation3 + $0x28] sm:$0xff]
    %v142 = vld [vmem:[#allocation3 + $0x30] sm:$0xff]
    %v143 = vld [vmem:[#allocation3 + $0x38] sm:$0xff]
    %v144 = vld [vmem:[#allocation3 + $0x40] sm:$0xff]
    %v145 = vld [vmem:[#allocation3 + $0x48] sm:$0xff]
    %v146 = vld [vmem:[#allocation3 + $0x50] sm:$0xff]
    %v147 = vld [vmem:[#allocation3 + $0x58] sm:$0xff]
    %v148 = vld [vmem:[#allocation3 + $0x60] sm:$0xff]
    %v149 = vld [vmem:[#allocation3 + $0x68] sm:$0xff]
    %v150 = vld [vmem:[#allocation3 + $0x70] sm:$0xff]
    %v151 = vld [vmem:[#allocation3 + $0x78] sm:$0xff]
    %v152 = vld [vmem:[%s2] sm:$0xf]
    %v154 = vlaneseq
    %v155 = vshrl.u32 %v154, 7
    %v156 = vsub.s32 0, %v155
    %v157 = vrot.slane %v152, %v156
    %v158 = vlaneseq
    %v159 = vshrl.u32 %v158, 7
    %v160 = vsub.s32 1, %v159
    %v161 = vrot.slane %v152, %v160
    %v162 = vlaneseq
    %v163 = vshrl.u32 %v162, 7
    %v164 = vsub.s32 2, %v163
    %v165 = vrot.slane %v152, %v164
    %v166 = vlaneseq
    %v167 = vshrl.u32 %v166, 7
    %v168 = vsub.s32 3, %v167
    %v169 = vrot.slane %v152, %v168
    %v190 = vunpack.c.l.b16 %v136
    %v191 = vunpack.c.h.b16 %v136
    %v192 = vunpack.c.l.b16 %v137
    %v193 = vunpack.c.h.b16 %v137
    %v194 = vunpack.c.l.b16 %v138
    %v195 = vunpack.c.h.b16 %v138
    %v196 = vunpack.c.l.b16 %v139
    %v197 = vunpack.c.h.b16 %v139
    %v198 = vunpack.c.l.b16 %v140
    %v199 = vunpack.c.h.b16 %v140
    %v200 = vunpack.c.l.b16 %v141
    %v201 = vunpack.c.h.b16 %v141
    %v202 = vunpack.c.l.b16 %v142
    %v203 = vunpack.c.h.b16 %v142
    %v204 = vunpack.c.l.b16 %v143
    %v205 = vunpack.c.h.b16 %v143
    %v206 = vunpack.c.l.b16 %v144
    %v207 = vunpack.c.h.b16 %v144
    %v208 = vunpack.c.l.b16 %v145
    %v209 = vunpack.c.h.b16 %v145
    %v210 = vunpack.c.l.b16 %v146
    %v211 = vunpack.c.h.b16 %v146
    %v212 = vunpack.c.l.b16 %v147
    %v213 = vunpack.c.h.b16 %v147
    %v214 = vunpack.c.l.b16 %v148
    %v215 = vunpack.c.h.b16 %v148
    %v216 = vunpack.c.l.b16 %v149
    %v217 = vunpack.c.h.b16 %v149
    %v218 = vunpack.c.l.b16 %v150
    %v219 = vunpack.c.h.b16 %v150
    %v220 = vunpack.c.l.b16 %v151
    %v221 = vunpack.c.h.b16 %v151
    %v222 = vpack.c.b16 %v194, %v190
    %v223 = vpack.c.b16 %v195, %v191
    %v224 = vpack.c.b16 %v196, %v192
    %v225 = vpack.c.b16 %v197, %v193
    %v226 = vpack.c.b16 %v202, %v198
    %v227 = vpack.c.b16 %v203, %v199
    %v228 = vpack.c.b16 %v204, %v200
    %v229 = vpack.c.b16 %v205, %v201
    %v230 = vpack.c.b16 %v210, %v206
    %v231 = vpack.c.b16 %v211, %v207
    %v232 = vpack.c.b16 %v212, %v208
    %v233 = vpack.c.b16 %v213, %v209
    %v234 = vpack.c.b16 %v218, %v214
    %v235 = vpack.c.b16 %v219, %v215
    %v236 = vpack.c.b16 %v220, %v216
    %v237 = vpack.c.b16 %v221, %v217
    %vm254 = vcmask 523264
    %v256 = vsel %vm254, %v112, 0
    %v259 = vsel %vm254, %v113, 0
    %v262 = vsel %vm254, %v114, 0
    %v265 = vsel %vm254, %v115, 0
    %v268 = vsel %vm254, %v116, 0
    %v271 = vsel %vm254, %v117, 0
    %v274 = vsel %vm254, %v118, 0
    %v277 = vsel %vm254, %v119, 0
    %v280 = vsel %vm254, %v120, 0
    %v283 = vsel %vm254, %v121, 0
    %v286 = vsel %vm254, %v122, 0
    %v289 = vsel %vm254, %v123, 0
    %v292 = vsel %vm254, %v124, 0
    %v295 = vsel %vm254, %v125, 0
    %v298 = vsel %vm254, %v126, 0
    %v301 = vsel %vm254, %v127, 0
    %v304 = vsel %vm254, %v128, 0
    %v307 = vsel %vm254, %v129, 0
    %v310 = vsel %vm254, %v130, 0
    %v313 = vsel %vm254, %v131, 0
    %v316 = vsel %vm254, %v132, 0
    %v319 = vsel %vm254, %v133, 0
    %v322 = vsel %vm254, %v134, 0
    %v325 = vsel %vm254, %v135, 0
    %327 = vmatprep.subr.bf16.mxu0 0
    %328 = vmatpush1.bf16.msra.mxu0 0
    %329 = vmatprep.subr.bf16.mxu0 0
    %330 = vmatpush1.bf16.msra.mxu0 0
    %331 = vmatprep.subr.bf16.mxu0 0
    %332 = vmatpush1.bf16.msra.mxu0 0
    %333 = vmatprep.subr.bf16.mxu0 0
    %334 = vmatpush1.bf16.msra.mxu0 0
    %335 = vmatprep.subr.bf16.mxu0 %v235
    %336 = vmatpush1.bf16.msra.mxu0 %v234
    %337 = vmatprep.subr.bf16.mxu0 %v231
    %338 = vmatpush1.bf16.msra.mxu0 %v230
    %339 = vmatprep.subr.bf16.mxu0 %v227
    %340 = vmatpush1.bf16.msra.mxu0 %v226
    %341 = vmatprep.subr.bf16.mxu0 %v223
    %342 = vmatpush1.bf16.msra.mxu0 %v222
    %343 = vmatprep.subr.bf16.mxu0 0
    %344 = vmatpush2.bf16.msra.mxu0 0
    %345 = vmatprep.subr.bf16.mxu0 0
    %346 = vmatpush2.bf16.msra.mxu0 0
    %347 = vmatprep.subr.bf16.mxu0 0
    %348 = vmatpush2.bf16.msra.mxu0 0
    %349 = vmatprep.subr.bf16.mxu0 0
    %350 = vmatpush2.bf16.msra.mxu0 0
    %351 = vmatprep.subr.bf16.mxu0 0
    %352 = vmatpush2.bf16.msra.mxu0 0
    %353 = vmatprep.subr.bf16.mxu0 0
    %354 = vmatpush2.bf16.msra.mxu0 0
    %355 = vmatprep.subr.bf16.mxu0 0
    %356 = vmatpush2.bf16.msra.mxu0 0
    %357 = vmatprep.subr.bf16.mxu0 0
    %358 = vmatpush2.bf16.msra.mxu0 0
    %359 = vmatprep.mubr.bf16.mxu0 0
    %360 = vmatmul.mubr.bf16.gmra.mxu0 %v256
    %v361 = vpop.f32.mrf.mxu0
    %v362 = vadd.f32 %v157, %v361
    %v363 = vpop.f32.mrf.mxu0
    %v364 = vadd.f32 %v161, %v363
    %v365 = vpop.f32.mrf.mxu0
    %v366 = vadd.f32 %v157, %v365
    %v367 = vpop.f32.mrf.mxu0
    %v368 = vadd.f32 %v161, %v367
    %369 = vmatprep.mubr.bf16.mxu0 0
    %370 = vmatmul.mubr.bf16.gmra.mxu0 %v259
    %v371 = vpop.f32.mrf.mxu0
    %v372 = vadd.f32 %v157, %v371
    %v373 = vpop.f32.mrf.mxu0
    %v374 = vadd.f32 %v161, %v373
    %v375 = vpop.f32.mrf.mxu0
    %v376 = vadd.f32 %v157, %v375
    %v377 = vpop.f32.mrf.mxu0
    %v378 = vadd.f32 %v161, %v377
    %379 = vmatprep.mubr.bf16.mxu0 0
    %380 = vmatmul.mubr.bf16.gmra.mxu0 %v262
    %v381 = vpop.f32.mrf.mxu0
    %v382 = vadd.f32 %v157, %v381
    %v383 = vpop.f32.mrf.mxu0
    %v384 = vadd.f32 %v161, %v383
    %v385 = vpop.f32.mrf.mxu0
    %v386 = vadd.f32 %v157, %v385
    %v387 = vpop.f32.mrf.mxu0
    %v388 = vadd.f32 %v161, %v387
    %389 = vmatprep.mubr.bf16.mxu0 0
    %390 = vmatmul.mubr.bf16.gmra.mxu0 %v265
    %v391 = vpop.f32.mrf.mxu0
    %v392 = vadd.f32 %v157, %v391
    %v393 = vpop.f32.mrf.mxu0
    %v394 = vadd.f32 %v161, %v393
    %v395 = vpop.f32.mrf.mxu0
    %v396 = vadd.f32 %v157, %v395
    %v397 = vpop.f32.mrf.mxu0
    %v398 = vadd.f32 %v161, %v397
    %399 = vmatprep.mubr.bf16.mxu0 0
    %400 = vmatmul.mubr.bf16.gmra.mxu0 %v268
    %v401 = vpop.f32.mrf.mxu0
    %v402 = vadd.f32 %v157, %v401
    %v403 = vpop.f32.mrf.mxu0
    %v404 = vadd.f32 %v161, %v403
    %v405 = vpop.f32.mrf.mxu0
    %v406 = vadd.f32 %v157, %v405
    %v407 = vpop.f32.mrf.mxu0
    %v408 = vadd.f32 %v161, %v407
    %409 = vmatprep.mubr.bf16.mxu0 0
    %410 = vmatmul.mubr.bf16.gmra.mxu0 %v271
    %v411 = vpop.f32.mrf.mxu0
    %v412 = vadd.f32 %v157, %v411
    %v413 = vpop.f32.mrf.mxu0
    %v414 = vadd.f32 %v161, %v413
    %v415 = vpop.f32.mrf.mxu0
    %v416 = vadd.f32 %v157, %v415
    %v417 = vpop.f32.mrf.mxu0
    %v418 = vadd.f32 %v161, %v417
    %419 = vmatprep.mubr.bf16.mxu0 0
    %420 = vmatmul.mubr.bf16.gmra.mxu0 %v274
    %v421 = vpop.f32.mrf.mxu0
    %v422 = vadd.f32 %v157, %v421
    %v423 = vpop.f32.mrf.mxu0
    %v424 = vadd.f32 %v161, %v423
    %v425 = vpop.f32.mrf.mxu0
    %v426 = vadd.f32 %v157, %v425
    %v427 = vpop.f32.mrf.mxu0
    %v428 = vadd.f32 %v161, %v427
    %429 = vmatprep.mubr.bf16.mxu0 0
    %430 = vmatmul.mubr.bf16.gmra.mxu0 %v277
    %v431 = vpop.f32.mrf.mxu0
    %v432 = vadd.f32 %v157, %v431
    %v433 = vpop.f32.mrf.mxu0
    %v434 = vadd.f32 %v161, %v433
    %v435 = vpop.f32.mrf.mxu0
    %v436 = vadd.f32 %v157, %v435
    %v437 = vpop.f32.mrf.mxu0
    %v438 = vadd.f32 %v161, %v437
    %439 = vmatprep.mubr.bf16.mxu0 0
    %440 = vmatmul.mubr.bf16.gmra.mxu0 %v280
    %v441 = vpop.f32.mrf.mxu0
    %v442 = vadd.f32 %v157, %v441
    %v443 = vpop.f32.mrf.mxu0
    %v444 = vadd.f32 %v161, %v443
    %v445 = vpop.f32.mrf.mxu0
    %v446 = vadd.f32 %v157, %v445
    %v447 = vpop.f32.mrf.mxu0
    %v448 = vadd.f32 %v161, %v447
    %449 = vmatprep.mubr.bf16.mxu0 0
    %450 = vmatmul.mubr.bf16.gmra.mxu0 %v283
    %v451 = vpop.f32.mrf.mxu0
    %v452 = vadd.f32 %v157, %v451
    %v453 = vpop.f32.mrf.mxu0
    %v454 = vadd.f32 %v161, %v453
    %v455 = vpop.f32.mrf.mxu0
    %v456 = vadd.f32 %v157, %v455
    %v457 = vpop.f32.mrf.mxu0
    %v458 = vadd.f32 %v161, %v457
    %459 = vmatprep.mubr.bf16.mxu0 0
    %460 = vmatmul.mubr.bf16.gmra.mxu0 %v286
    %v461 = vpop.f32.mrf.mxu0
    %v462 = vadd.f32 %v157, %v461
    %v463 = vpop.f32.mrf.mxu0
    %v464 = vadd.f32 %v161, %v463
    %v465 = vpop.f32.mrf.mxu0
    %v466 = vadd.f32 %v157, %v465
    %v467 = vpop.f32.mrf.mxu0
    %v468 = vadd.f32 %v161, %v467
    %469 = vmatprep.mubr.bf16.mxu0 0
    %470 = vmatmul.mubr.bf16.gmra.mxu0 %v289
    %v471 = vpop.f32.mrf.mxu0
    %v472 = vadd.f32 %v157, %v471
    %v473 = vpop.f32.mrf.mxu0
    %v474 = vadd.f32 %v161, %v473
    %v475 = vpop.f32.mrf.mxu0
    %v476 = vadd.f32 %v157, %v475
    %v477 = vpop.f32.mrf.mxu0
    %v478 = vadd.f32 %v161, %v477
    %479 = vmatprep.mubr.bf16.mxu0 0
    %480 = vmatmul.mubr.bf16.gmra.mxu0 %v292
    %v481 = vpop.f32.mrf.mxu0
    %v482 = vadd.f32 %v157, %v481
    %v483 = vpop.f32.mrf.mxu0
    %v484 = vadd.f32 %v161, %v483
    %v485 = vpop.f32.mrf.mxu0
    %v486 = vadd.f32 %v157, %v485
    %v487 = vpop.f32.mrf.mxu0
    %v488 = vadd.f32 %v161, %v487
    %489 = vmatprep.mubr.bf16.mxu0 0
    %490 = vmatmul.mubr.bf16.gmra.mxu0 %v295
    %v491 = vpop.f32.mrf.mxu0
    %v492 = vadd.f32 %v157, %v491
    %v493 = vpop.f32.mrf.mxu0
    %v494 = vadd.f32 %v161, %v493
    %v495 = vpop.f32.mrf.mxu0
    %v496 = vadd.f32 %v157, %v495
    %v497 = vpop.f32.mrf.mxu0
    %v498 = vadd.f32 %v161, %v497
    %499 = vmatprep.mubr.bf16.mxu0 0
    %500 = vmatmul.mubr.bf16.gmra.mxu0 %v298
    %v501 = vpop.f32.mrf.mxu0
    %v502 = vadd.f32 %v157, %v501
    %v503 = vpop.f32.mrf.mxu0
    %v504 = vadd.f32 %v161, %v503
    %v505 = vpop.f32.mrf.mxu0
    %v506 = vadd.f32 %v157, %v505
    %v507 = vpop.f32.mrf.mxu0
    %v508 = vadd.f32 %v161, %v507
    %509 = vmatprep.mubr.bf16.mxu0 0
    %510 = vmatmul.mubr.bf16.gmra.mxu0 %v301
    %v511 = vpop.f32.mrf.mxu0
    %v512 = vadd.f32 %v157, %v511
    %v513 = vpop.f32.mrf.mxu0
    %v514 = vadd.f32 %v161, %v513
    %v515 = vpop.f32.mrf.mxu0
    %v516 = vadd.f32 %v157, %v515
    %v517 = vpop.f32.mrf.mxu0
    %v518 = vadd.f32 %v161, %v517
    %519 = vmatprep.mubr.bf16.mxu0 0
    %520 = vmatmul.mubr.bf16.gmra.mxu0 %v304
    %v521 = vpop.f32.mrf.mxu0
    %v522 = vadd.f32 %v157, %v521
    %v523 = vpop.f32.mrf.mxu0
    %v524 = vadd.f32 %v161, %v523
    %v525 = vpop.f32.mrf.mxu0
    %v526 = vadd.f32 %v157, %v525
    %v527 = vpop.f32.mrf.mxu0
    %v528 = vadd.f32 %v161, %v527
    %529 = vmatprep.mubr.bf16.mxu0 0
    %530 = vmatmul.mubr.bf16.gmra.mxu0 %v307
    %v531 = vpop.f32.mrf.mxu0
    %v532 = vadd.f32 %v157, %v531
    %v533 = vpop.f32.mrf.mxu0
    %v534 = vadd.f32 %v161, %v533
    %v535 = vpop.f32.mrf.mxu0
    %v536 = vadd.f32 %v157, %v535
    %v537 = vpop.f32.mrf.mxu0
    %v538 = vadd.f32 %v161, %v537
    %539 = vmatprep.mubr.bf16.mxu0 0
    %540 = vmatmul.mubr.bf16.gmra.mxu0 %v310
    %v541 = vpop.f32.mrf.mxu0
    %v542 = vadd.f32 %v157, %v541
    %v543 = vpop.f32.mrf.mxu0
    %v544 = vadd.f32 %v161, %v543
    %v545 = vpop.f32.mrf.mxu0
    %v546 = vadd.f32 %v157, %v545
    %v547 = vpop.f32.mrf.mxu0
    %v548 = vadd.f32 %v161, %v547
    %549 = vmatprep.mubr.bf16.mxu0 0
    %550 = vmatmul.mubr.bf16.gmra.mxu0 %v313
    %v551 = vpop.f32.mrf.mxu0
    %v552 = vadd.f32 %v157, %v551
    %v553 = vpop.f32.mrf.mxu0
    %v554 = vadd.f32 %v161, %v553
    %v555 = vpop.f32.mrf.mxu0
    %v556 = vadd.f32 %v157, %v555
    %v557 = vpop.f32.mrf.mxu0
    %v558 = vadd.f32 %v161, %v557
    %559 = vmatprep.mubr.bf16.mxu0 0
    %560 = vmatmul.mubr.bf16.gmra.mxu0 %v316
    %v561 = vpop.f32.mrf.mxu0
    %v562 = vadd.f32 %v157, %v561
    %v563 = vpop.f32.mrf.mxu0
    %v564 = vadd.f32 %v161, %v563
    %v565 = vpop.f32.mrf.mxu0
    %v566 = vadd.f32 %v157, %v565
    %v567 = vpop.f32.mrf.mxu0
    %v568 = vadd.f32 %v161, %v567
    %569 = vmatprep.mubr.bf16.mxu0 0
    %570 = vmatmul.mubr.bf16.gmra.mxu0 %v319
    %v571 = vpop.f32.mrf.mxu0
    %v572 = vadd.f32 %v157, %v571
    %v573 = vpop.f32.mrf.mxu0
    %v574 = vadd.f32 %v161, %v573
    %v575 = vpop.f32.mrf.mxu0
    %v576 = vadd.f32 %v157, %v575
    %v577 = vpop.f32.mrf.mxu0
    %v578 = vadd.f32 %v161, %v577
    %579 = vmatprep.mubr.bf16.mxu0 0
    %580 = vmatmul.mubr.bf16.gmra.mxu0 %v322
    %v581 = vpop.f32.mrf.mxu0
    %v582 = vadd.f32 %v157, %v581
    %v583 = vpop.f32.mrf.mxu0
    %v584 = vadd.f32 %v161, %v583
    %v585 = vpop.f32.mrf.mxu0
    %v586 = vadd.f32 %v157, %v585
    %v587 = vpop.f32.mrf.mxu0
    %v588 = vadd.f32 %v161, %v587
    %589 = vmatprep.mubr.bf16.mxu0 0
    %590 = vmatmul.mubr.bf16.gmra.mxu0 %v325
    %v591 = vpop.f32.mrf.mxu0
    %v592 = vadd.f32 %v157, %v591
    %v593 = vpop.f32.mrf.mxu0
    %v594 = vadd.f32 %v161, %v593
    %v595 = vpop.f32.mrf.mxu0
    %v596 = vadd.f32 %v157, %v595
    %v597 = vpop.f32.mrf.mxu0
    %v598 = vadd.f32 %v161, %v597
    %599 = vdwg.mxu0
    %600 = vmatprep.subr.bf16.mxu0 0
    %601 = vmatpush1.bf16.msra.mxu0 0
    %602 = vmatprep.subr.bf16.mxu0 0
    %603 = vmatpush1.bf16.msra.mxu0 0
    %604 = vmatprep.subr.bf16.mxu0 0
    %605 = vmatpush1.bf16.msra.mxu0 0
    %606 = vmatprep.subr.bf16.mxu0 0
    %607 = vmatpush1.bf16.msra.mxu0 0
    %608 = vmatprep.subr.bf16.mxu0 %v237
    %609 = vmatpush1.bf16.msra.mxu0 %v236
    %610 = vmatprep.subr.bf16.mxu0 %v233
    %611 = vmatpush1.bf16.msra.mxu0 %v232
    %612 = vmatprep.subr.bf16.mxu0 %v229
    %613 = vmatpush1.bf16.msra.mxu0 %v228
    %614 = vmatprep.subr.bf16.mxu0 %v225
    %615 = vmatpush1.bf16.msra.mxu0 %v224
    %616 = vmatprep.subr.bf16.mxu0 0
    %617 = vmatpush2.bf16.msra.mxu0 0
    %618 = vmatprep.subr.bf16.mxu0 0
    %619 = vmatpush2.bf16.msra.mxu0 0
    %620 = vmatprep.subr.bf16.mxu0 0
    %621 = vmatpush2.bf16.msra.mxu0 0
    %622 = vmatprep.subr.bf16.mxu0 0
    %623 = vmatpush2.bf16.msra.mxu0 0
    %624 = vmatprep.subr.bf16.mxu0 0
    %625 = vmatpush2.bf16.msra.mxu0 0
    %626 = vmatprep.subr.bf16.mxu0 0
    %627 = vmatpush2.bf16.msra.mxu0 0
    %628 = vmatprep.subr.bf16.mxu0 0
    %629 = vmatpush2.bf16.msra.mxu0 0
    %630 = vmatprep.subr.bf16.mxu0 0
    %631 = vmatpush2.bf16.msra.mxu0 0
    %632 = vmatprep.mubr.bf16.mxu0 0
    %633 = vmatmul.mubr.bf16.gmra.mxu0 %v256
    %v634 = vpop.f32.mrf.mxu0
    %v635 = vadd.f32 %v165, %v634
    %v636 = vpop.f32.mrf.mxu0
    %v637 = vadd.f32 %v169, %v636
    %v638 = vpop.f32.mrf.mxu0
    %v639 = vadd.f32 %v165, %v638
    %v640 = vpop.f32.mrf.mxu0
    %v641 = vadd.f32 %v169, %v640
    %642 = vmatprep.mubr.bf16.mxu0 0
    %643 = vmatmul.mubr.bf16.gmra.mxu0 %v259
    %v644 = vpop.f32.mrf.mxu0
    %v645 = vadd.f32 %v165, %v644
    %v646 = vpop.f32.mrf.mxu0
    %v647 = vadd.f32 %v169, %v646
    %v648 = vpop.f32.mrf.mxu0
    %v649 = vadd.f32 %v165, %v648
    %v650 = vpop.f32.mrf.mxu0
    %v651 = vadd.f32 %v169, %v650
    %652 = vmatprep.mubr.bf16.mxu0 0
    %653 = vmatmul.mubr.bf16.gmra.mxu0 %v262
    %v654 = vpop.f32.mrf.mxu0
    %v655 = vadd.f32 %v165, %v654
    %v656 = vpop.f32.mrf.mxu0
    %v657 = vadd.f32 %v169, %v656
    %v658 = vpop.f32.mrf.mxu0
    %v659 = vadd.f32 %v165, %v658
    %v660 = vpop.f32.mrf.mxu0
    %v661 = vadd.f32 %v169, %v660
    %662 = vmatprep.mubr.bf16.mxu0 0
    %663 = vmatmul.mubr.bf16.gmra.mxu0 %v265
    %v664 = vpop.f32.mrf.mxu0
    %v665 = vadd.f32 %v165, %v664
    %v666 = vpop.f32.mrf.mxu0
    %v667 = vadd.f32 %v169, %v666
    %v668 = vpop.f32.mrf.mxu0
    %v669 = vadd.f32 %v165, %v668
    %v670 = vpop.f32.mrf.mxu0
    %v671 = vadd.f32 %v169, %v670
    %672 = vmatprep.mubr.bf16.mxu0 0
    %673 = vmatmul.mubr.bf16.gmra.mxu0 %v268
    %v674 = vpop.f32.mrf.mxu0
    %v675 = vadd.f32 %v165, %v674
    %v676 = vpop.f32.mrf.mxu0
    %v677 = vadd.f32 %v169, %v676
    %v678 = vpop.f32.mrf.mxu0
    %v679 = vadd.f32 %v165, %v678
    %v680 = vpop.f32.mrf.mxu0
    %v681 = vadd.f32 %v169, %v680
    %682 = vmatprep.mubr.bf16.mxu0 0
    %683 = vmatmul.mubr.bf16.gmra.mxu0 %v271
    %v684 = vpop.f32.mrf.mxu0
    %v685 = vadd.f32 %v165, %v684
    %v686 = vpop.f32.mrf.mxu0
    %v687 = vadd.f32 %v169, %v686
    %v688 = vpop.f32.mrf.mxu0
    %v689 = vadd.f32 %v165, %v688
    %v690 = vpop.f32.mrf.mxu0
    %v691 = vadd.f32 %v169, %v690
    %692 = vmatprep.mubr.bf16.mxu0 0
    %693 = vmatmul.mubr.bf16.gmra.mxu0 %v274
    %v694 = vpop.f32.mrf.mxu0
    %v695 = vadd.f32 %v165, %v694
    %v696 = vpop.f32.mrf.mxu0
    %v697 = vadd.f32 %v169, %v696
    %v698 = vpop.f32.mrf.mxu0
    %v699 = vadd.f32 %v165, %v698
    %v700 = vpop.f32.mrf.mxu0
    %v701 = vadd.f32 %v169, %v700
    %702 = vmatprep.mubr.bf16.mxu0 0
    %703 = vmatmul.mubr.bf16.gmra.mxu0 %v277
    %v704 = vpop.f32.mrf.mxu0
    %v705 = vadd.f32 %v165, %v704
    %v706 = vpop.f32.mrf.mxu0
    %v707 = vadd.f32 %v169, %v706
    %v708 = vpop.f32.mrf.mxu0
    %v709 = vadd.f32 %v165, %v708
    %v710 = vpop.f32.mrf.mxu0
    %v711 = vadd.f32 %v169, %v710
    %712 = vmatprep.mubr.bf16.mxu0 0
    %713 = vmatmul.mubr.bf16.gmra.mxu0 %v280
    %v714 = vpop.f32.mrf.mxu0
    %v715 = vadd.f32 %v165, %v714
    %v716 = vpop.f32.mrf.mxu0
    %v717 = vadd.f32 %v169, %v716
    %v718 = vpop.f32.mrf.mxu0
    %v719 = vadd.f32 %v165, %v718
    %v720 = vpop.f32.mrf.mxu0
    %v721 = vadd.f32 %v169, %v720
    %722 = vmatprep.mubr.bf16.mxu0 0
    %723 = vmatmul.mubr.bf16.gmra.mxu0 %v283
    %v724 = vpop.f32.mrf.mxu0
    %v725 = vadd.f32 %v165, %v724
    %v726 = vpop.f32.mrf.mxu0
    %v727 = vadd.f32 %v169, %v726
    %v728 = vpop.f32.mrf.mxu0
    %v729 = vadd.f32 %v165, %v728
    %v730 = vpop.f32.mrf.mxu0
    %v731 = vadd.f32 %v169, %v730
    %732 = vmatprep.mubr.bf16.mxu0 0
    %733 = vmatmul.mubr.bf16.gmra.mxu0 %v286
    %v734 = vpop.f32.mrf.mxu0
    %v735 = vadd.f32 %v165, %v734
    %v736 = vpop.f32.mrf.mxu0
    %v737 = vadd.f32 %v169, %v736
    %v738 = vpop.f32.mrf.mxu0
    %v739 = vadd.f32 %v165, %v738
    %v740 = vpop.f32.mrf.mxu0
    %v741 = vadd.f32 %v169, %v740
    %742 = vmatprep.mubr.bf16.mxu0 0
    %743 = vmatmul.mubr.bf16.gmra.mxu0 %v289
    %v744 = vpop.f32.mrf.mxu0
    %v745 = vadd.f32 %v165, %v744
    %v746 = vpop.f32.mrf.mxu0
    %v747 = vadd.f32 %v169, %v746
    %v748 = vpop.f32.mrf.mxu0
    %v749 = vadd.f32 %v165, %v748
    %v750 = vpop.f32.mrf.mxu0
    %v751 = vadd.f32 %v169, %v750
    %752 = vmatprep.mubr.bf16.mxu0 0
    %753 = vmatmul.mubr.bf16.gmra.mxu0 %v292
    %v754 = vpop.f32.mrf.mxu0
    %v755 = vadd.f32 %v165, %v754
    %v756 = vpop.f32.mrf.mxu0
    %v757 = vadd.f32 %v169, %v756
    %v758 = vpop.f32.mrf.mxu0
    %v759 = vadd.f32 %v165, %v758
    %v760 = vpop.f32.mrf.mxu0
    %v761 = vadd.f32 %v169, %v760
    %762 = vmatprep.mubr.bf16.mxu0 0
    %763 = vmatmul.mubr.bf16.gmra.mxu0 %v295
    %v764 = vpop.f32.mrf.mxu0
    %v765 = vadd.f32 %v165, %v764
    %v766 = vpop.f32.mrf.mxu0
    %v767 = vadd.f32 %v169, %v766
    %v768 = vpop.f32.mrf.mxu0
    %v769 = vadd.f32 %v165, %v768
    %v770 = vpop.f32.mrf.mxu0
    %v771 = vadd.f32 %v169, %v770
    %772 = vmatprep.mubr.bf16.mxu0 0
    %773 = vmatmul.mubr.bf16.gmra.mxu0 %v298
    %v774 = vpop.f32.mrf.mxu0
    %v775 = vadd.f32 %v165, %v774
    %v776 = vpop.f32.mrf.mxu0
    %v777 = vadd.f32 %v169, %v776
    %v778 = vpop.f32.mrf.mxu0
    %v779 = vadd.f32 %v165, %v778
    %v780 = vpop.f32.mrf.mxu0
    %v781 = vadd.f32 %v169, %v780
    %782 = vmatprep.mubr.bf16.mxu0 0
    %783 = vmatmul.mubr.bf16.gmra.mxu0 %v301
    %v784 = vpop.f32.mrf.mxu0
    %v785 = vadd.f32 %v165, %v784
    %v786 = vpop.f32.mrf.mxu0
    %v787 = vadd.f32 %v169, %v786
    %v788 = vpop.f32.mrf.mxu0
    %v789 = vadd.f32 %v165, %v788
    %v790 = vpop.f32.mrf.mxu0
    %v791 = vadd.f32 %v169, %v790
    %792 = vmatprep.mubr.bf16.mxu0 0
    %793 = vmatmul.mubr.bf16.gmra.mxu0 %v304
    %v794 = vpop.f32.mrf.mxu0
    %v795 = vadd.f32 %v165, %v794
    %v796 = vpop.f32.mrf.mxu0
    %v797 = vadd.f32 %v169, %v796
    %v798 = vpop.f32.mrf.mxu0
    %v799 = vadd.f32 %v165, %v798
    %v800 = vpop.f32.mrf.mxu0
    %v801 = vadd.f32 %v169, %v800
    %802 = vmatprep.mubr.bf16.mxu0 0
    %803 = vmatmul.mubr.bf16.gmra.mxu0 %v307
    %v804 = vpop.f32.mrf.mxu0
    %v805 = vadd.f32 %v165, %v804
    %v806 = vpop.f32.mrf.mxu0
    %v807 = vadd.f32 %v169, %v806
    %v808 = vpop.f32.mrf.mxu0
    %v809 = vadd.f32 %v165, %v808
    %v810 = vpop.f32.mrf.mxu0
    %v811 = vadd.f32 %v169, %v810
    %812 = vmatprep.mubr.bf16.mxu0 0
    %813 = vmatmul.mubr.bf16.gmra.mxu0 %v310
    %v814 = vpop.f32.mrf.mxu0
    %v815 = vadd.f32 %v165, %v814
    %v816 = vpop.f32.mrf.mxu0
    %v817 = vadd.f32 %v169, %v816
    %v818 = vpop.f32.mrf.mxu0
    %v819 = vadd.f32 %v165, %v818
    %v820 = vpop.f32.mrf.mxu0
    %v821 = vadd.f32 %v169, %v820
    %822 = vmatprep.mubr.bf16.mxu0 0
    %823 = vmatmul.mubr.bf16.gmra.mxu0 %v313
    %v824 = vpop.f32.mrf.mxu0
    %v825 = vadd.f32 %v165, %v824
    %v826 = vpop.f32.mrf.mxu0
    %v827 = vadd.f32 %v169, %v826
    %v828 = vpop.f32.mrf.mxu0
    %v829 = vadd.f32 %v165, %v828
    %v830 = vpop.f32.mrf.mxu0
    %v831 = vadd.f32 %v169, %v830
    %832 = vmatprep.mubr.bf16.mxu0 0
    %833 = vmatmul.mubr.bf16.gmra.mxu0 %v316
    %v834 = vpop.f32.mrf.mxu0
    %v835 = vadd.f32 %v165, %v834
    %v836 = vpop.f32.mrf.mxu0
    %v837 = vadd.f32 %v169, %v836
    %v838 = vpop.f32.mrf.mxu0
    %v839 = vadd.f32 %v165, %v838
    %v840 = vpop.f32.mrf.mxu0
    %v841 = vadd.f32 %v169, %v840
    %842 = vmatprep.mubr.bf16.mxu0 0
    %843 = vmatmul.mubr.bf16.gmra.mxu0 %v319
    %v844 = vpop.f32.mrf.mxu0
    %v845 = vadd.f32 %v165, %v844
    %v846 = vpop.f32.mrf.mxu0
    %v847 = vadd.f32 %v169, %v846
    %v848 = vpop.f32.mrf.mxu0
    %v849 = vadd.f32 %v165, %v848
    %v850 = vpop.f32.mrf.mxu0
    %v851 = vadd.f32 %v169, %v850
    %852 = vmatprep.mubr.bf16.mxu0 0
    %853 = vmatmul.mubr.bf16.gmra.mxu0 %v322
    %v854 = vpop.f32.mrf.mxu0
    %v855 = vadd.f32 %v165, %v854
    %v856 = vpop.f32.mrf.mxu0
    %v857 = vadd.f32 %v169, %v856
    %v858 = vpop.f32.mrf.mxu0
    %v859 = vadd.f32 %v165, %v858
    %v860 = vpop.f32.mrf.mxu0
    %v861 = vadd.f32 %v169, %v860
    %862 = vmatprep.mubr.bf16.mxu0 0
    %863 = vmatmul.mubr.bf16.gmra.mxu0 %v325
    %v864 = vpop.f32.mrf.mxu0
    %v865 = vadd.f32 %v165, %v864
    %v866 = vpop.f32.mrf.mxu0
    %v867 = vadd.f32 %v169, %v866
    %v868 = vpop.f32.mrf.mxu0
    %v869 = vadd.f32 %v165, %v868
    %v870 = vpop.f32.mrf.mxu0
    %v871 = vadd.f32 %v169, %v870
    %872 = vdwg.mxu0
    %v873 = vmax.f32 %v362, 0.0
    %v874 = vmax.f32 %v364, 0.0
    %v875 = vmax.f32 %v635, 0.0
    %v876 = vmax.f32 %v637, 0.0
    %v877 = vmax.f32 %v366, 0.0
    %v878 = vmax.f32 %v368, 0.0
    %v879 = vmax.f32 %v639, 0.0
    %v880 = vmax.f32 %v641, 0.0
    %v881 = vmax.f32 %v372, 0.0
    %v882 = vmax.f32 %v374, 0.0
    %v883 = vmax.f32 %v645, 0.0
    %v884 = vmax.f32 %v647, 0.0
    %v885 = vmax.f32 %v376, 0.0
    %v886 = vmax.f32 %v378, 0.0
    %v887 = vmax.f32 %v649, 0.0
    %v888 = vmax.f32 %v651, 0.0
    %v889 = vmax.f32 %v382, 0.0
    %v890 = vmax.f32 %v384, 0.0
    %v891 = vmax.f32 %v655, 0.0
    %v892 = vmax.f32 %v657, 0.0
    %v893 = vmax.f32 %v386, 0.0
    %v894 = vmax.f32 %v388, 0.0
    %v895 = vmax.f32 %v659, 0.0
    %v896 = vmax.f32 %v661, 0.0
    %v897 = vmax.f32 %v392, 0.0
    %v898 = vmax.f32 %v394, 0.0
    %v899 = vmax.f32 %v665, 0.0
    %v900 = vmax.f32 %v667, 0.0
    %v901 = vmax.f32 %v396, 0.0
    %v902 = vmax.f32 %v398, 0.0
    %v903 = vmax.f32 %v669, 0.0
    %v904 = vmax.f32 %v671, 0.0
    %v905 = vmax.f32 %v402, 0.0
    %v906 = vmax.f32 %v404, 0.0
    %v907 = vmax.f32 %v675, 0.0
    %v908 = vmax.f32 %v677, 0.0
    %v909 = vmax.f32 %v406, 0.0
    %v910 = vmax.f32 %v408, 0.0
    %v911 = vmax.f32 %v679, 0.0
    %v912 = vmax.f32 %v681, 0.0
    %v913 = vmax.f32 %v412, 0.0
    %v914 = vmax.f32 %v414, 0.0
    %v915 = vmax.f32 %v685, 0.0
    %v916 = vmax.f32 %v687, 0.0
    %v917 = vmax.f32 %v416, 0.0
    %v918 = vmax.f32 %v418, 0.0
    %v919 = vmax.f32 %v689, 0.0
    %v920 = vmax.f32 %v691, 0.0
    %v921 = vmax.f32 %v422, 0.0
    %v922 = vmax.f32 %v424, 0.0
    %v923 = vmax.f32 %v695, 0.0
    %v924 = vmax.f32 %v697, 0.0
    %v925 = vmax.f32 %v426, 0.0
    %v926 = vmax.f32 %v428, 0.0
    %v927 = vmax.f32 %v699, 0.0
    %v928 = vmax.f32 %v701, 0.0
    %v929 = vmax.f32 %v432, 0.0
    %v930 = vmax.f32 %v434, 0.0
    %v931 = vmax.f32 %v705, 0.0
    %v932 = vmax.f32 %v707, 0.0
    %v933 = vmax.f32 %v436, 0.0
    %v934 = vmax.f32 %v438, 0.0
    %v935 = vmax.f32 %v709, 0.0
    %v936 = vmax.f32 %v711, 0.0
    %v937 = vmax.f32 %v442, 0.0
    %v938 = vmax.f32 %v444, 0.0
    %v939 = vmax.f32 %v715, 0.0
    %v940 = vmax.f32 %v717, 0.0
    %v941 = vmax.f32 %v446, 0.0
    %v942 = vmax.f32 %v448, 0.0
    %v943 = vmax.f32 %v719, 0.0
    %v944 = vmax.f32 %v721, 0.0
    %v945 = vmax.f32 %v452, 0.0
    %v946 = vmax.f32 %v454, 0.0
    %v947 = vmax.f32 %v725, 0.0
    %v948 = vmax.f32 %v727, 0.0
    %v949 = vmax.f32 %v456, 0.0
    %v950 = vmax.f32 %v458, 0.0
    %v951 = vmax.f32 %v729, 0.0
    %v952 = vmax.f32 %v731, 0.0
    %v953 = vmax.f32 %v462, 0.0
    %v954 = vmax.f32 %v464, 0.0
    %v955 = vmax.f32 %v735, 0.0
    %v956 = vmax.f32 %v737, 0.0
    %v957 = vmax.f32 %v466, 0.0
    %v958 = vmax.f32 %v468, 0.0
    %v959 = vmax.f32 %v739, 0.0
    %v960 = vmax.f32 %v741, 0.0
    %v961 = vmax.f32 %v472, 0.0
    %v962 = vmax.f32 %v474, 0.0
    %v963 = vmax.f32 %v745, 0.0
    %v964 = vmax.f32 %v747, 0.0
    %v965 = vmax.f32 %v476, 0.0
    %v966 = vmax.f32 %v478, 0.0
    %v967 = vmax.f32 %v749, 0.0
    %v968 = vmax.f32 %v751, 0.0
    %v969 = vmax.f32 %v482, 0.0
    %v970 = vmax.f32 %v484, 0.0
    %v971 = vmax.f32 %v755, 0.0
    %v972 = vmax.f32 %v757, 0.0
    %v973 = vmax.f32 %v486, 0.0
    %v974 = vmax.f32 %v488, 0.0
    %v975 = vmax.f32 %v759, 0.0
    %v976 = vmax.f32 %v761, 0.0
    %v977 = vmax.f32 %v492, 0.0
    %v978 = vmax.f32 %v494, 0.0
    %v979 = vmax.f32 %v765, 0.0
    %v980 = vmax.f32 %v767, 0.0
    %v981 = vmax.f32 %v496, 0.0
    %v982 = vmax.f32 %v498, 0.0
    %v983 = vmax.f32 %v769, 0.0
    %v984 = vmax.f32 %v771, 0.0
    %v985 = vmax.f32 %v502, 0.0
    %v986 = vmax.f32 %v504, 0.0
    %v987 = vmax.f32 %v775, 0.0
    %v988 = vmax.f32 %v777, 0.0
    %v989 = vmax.f32 %v506, 0.0
    %v990 = vmax.f32 %v508, 0.0
    %v991 = vmax.f32 %v779, 0.0
    %v992 = vmax.f32 %v781, 0.0
    %v993 = vmax.f32 %v512, 0.0
    %v994 = vmax.f32 %v514, 0.0
    %v995 = vmax.f32 %v785, 0.0
    %v996 = vmax.f32 %v787, 0.0
    %v997 = vmax.f32 %v516, 0.0
    %v998 = vmax.f32 %v518, 0.0
    %v999 = vmax.f32 %v789, 0.0
    %v1000 = vmax.f32 %v791, 0.0
    %v1001 = vmax.f32 %v522, 0.0
    %v1002 = vmax.f32 %v524, 0.0
    %v1003 = vmax.f32 %v795, 0.0
    %v1004 = vmax.f32 %v797, 0.0
    %v1005 = vmax.f32 %v526, 0.0
    %v1006 = vmax.f32 %v528, 0.0
    %v1007 = vmax.f32 %v799, 0.0
    %v1008 = vmax.f32 %v801, 0.0
    %v1009 = vmax.f32 %v532, 0.0
    %v1010 = vmax.f32 %v534, 0.0
    %v1011 = vmax.f32 %v805, 0.0
    %v1012 = vmax.f32 %v807, 0.0
    %v1013 = vmax.f32 %v536, 0.0
    %v1014 = vmax.f32 %v538, 0.0
    %v1015 = vmax.f32 %v809, 0.0
    %v1016 = vmax.f32 %v811, 0.0
    %v1017 = vmax.f32 %v542, 0.0
    %v1018 = vmax.f32 %v544, 0.0
    %v1019 = vmax.f32 %v815, 0.0
    %v1020 = vmax.f32 %v817, 0.0
    %v1021 = vmax.f32 %v546, 0.0
    %v1022 = vmax.f32 %v548, 0.0
    %v1023 = vmax.f32 %v819, 0.0
    %v1024 = vmax.f32 %v821, 0.0
    %v1025 = vmax.f32 %v552, 0.0
    %v1026 = vmax.f32 %v554, 0.0
    %v1027 = vmax.f32 %v825, 0.0
    %v1028 = vmax.f32 %v827, 0.0
    %v1029 = vmax.f32 %v556, 0.0
    %v1030 = vmax.f32 %v558, 0.0
    %v1031 = vmax.f32 %v829, 0.0
    %v1032 = vmax.f32 %v831, 0.0
    %v1033 = vmax.f32 %v562, 0.0
    %v1034 = vmax.f32 %v564, 0.0
    %v1035 = vmax.f32 %v835, 0.0
    %v1036 = vmax.f32 %v837, 0.0
    %v1037 = vmax.f32 %v566, 0.0
    %v1038 = vmax.f32 %v568, 0.0
    %v1039 = vmax.f32 %v839, 0.0
    %v1040 = vmax.f32 %v841, 0.0
    %v1041 = vmax.f32 %v572, 0.0
    %v1042 = vmax.f32 %v574, 0.0
    %v1043 = vmax.f32 %v845, 0.0
    %v1044 = vmax.f32 %v847, 0.0
    %v1045 = vmax.f32 %v576, 0.0
    %v1046 = vmax.f32 %v578, 0.0
    %v1047 = vmax.f32 %v849, 0.0
    %v1048 = vmax.f32 %v851, 0.0
    %v1049 = vmax.f32 %v582, 0.0
    %v1050 = vmax.f32 %v584, 0.0
    %v1051 = vmax.f32 %v855, 0.0
    %v1052 = vmax.f32 %v857, 0.0
    %v1053 = vmax.f32 %v586, 0.0
    %v1054 = vmax.f32 %v588, 0.0
    %v1055 = vmax.f32 %v859, 0.0
    %v1056 = vmax.f32 %v861, 0.0
    %v1057 = vmax.f32 %v592, 0.0
    %v1058 = vmax.f32 %v594, 0.0
    %v1059 = vmax.f32 %v865, 0.0
    %v1060 = vmax.f32 %v867, 0.0
    %v1061 = vmax.f32 %v596, 0.0
    %v1062 = vmax.f32 %v598, 0.0
    %v1063 = vmax.f32 %v869, 0.0
    %v1064 = vmax.f32 %v871, 0.0
    %v1065 = vpack.c.bf16 %v877, %v873
    %v1066 = vpack.c.bf16 %v878, %v874
    %v1067 = vpack.c.bf16 %v879, %v875
    %v1068 = vpack.c.bf16 %v880, %v876
    %v1069 = vpack.c.bf16 %v885, %v881
    %v1070 = vpack.c.bf16 %v886, %v882
    %v1071 = vpack.c.bf16 %v887, %v883
    %v1072 = vpack.c.bf16 %v888, %v884
    %v1073 = vpack.c.bf16 %v893, %v889
    %v1074 = vpack.c.bf16 %v894, %v890
    %v1075 = vpack.c.bf16 %v895, %v891
    %v1076 = vpack.c.bf16 %v896, %v892
    %v1077 = vpack.c.bf16 %v901, %v897
    %v1078 = vpack.c.bf16 %v902, %v898
    %v1079 = vpack.c.bf16 %v903, %v899
    %v1080 = vpack.c.bf16 %v904, %v900
    %v1081 = vpack.c.bf16 %v909, %v905
    %v1082 = vpack.c.bf16 %v910, %v906
    %v1083 = vpack.c.bf16 %v911, %v907
    %v1084 = vpack.c.bf16 %v912, %v908
    %v1085 = vpack.c.bf16 %v917, %v913
    %v1086 = vpack.c.bf16 %v918, %v914
    %v1087 = vpack.c.bf16 %v919, %v915
    %v1088 = vpack.c.bf16 %v920, %v916
    %v1089 = vpack.c.bf16 %v925, %v921
    %v1090 = vpack.c.bf16 %v926, %v922
    %v1091 = vpack.c.bf16 %v927, %v923
    %v1092 = vpack.c.bf16 %v928, %v924
    %v1093 = vpack.c.bf16 %v933, %v929
    %v1094 = vpack.c.bf16 %v934, %v930
    %v1095 = vpack.c.bf16 %v935, %v931
    %v1096 = vpack.c.bf16 %v936, %v932
    %v1097 = vpack.c.bf16 %v941, %v937
    %v1098 = vpack.c.bf16 %v942, %v938
    %v1099 = vpack.c.bf16 %v943, %v939
    %v1100 = vpack.c.bf16 %v944, %v940
    %v1101 = vpack.c.bf16 %v949, %v945
    %v1102 = vpack.c.bf16 %v950, %v946
    %v1103 = vpack.c.bf16 %v951, %v947
    %v1104 = vpack.c.bf16 %v952, %v948
    %v1105 = vpack.c.bf16 %v957, %v953
    %v1106 = vpack.c.bf16 %v958, %v954
    %v1107 = vpack.c.bf16 %v959, %v955
    %v1108 = vpack.c.bf16 %v960, %v956
    %v1109 = vpack.c.bf16 %v965, %v961
    %v1110 = vpack.c.bf16 %v966, %v962
    %v1111 = vpack.c.bf16 %v967, %v963
    %v1112 = vpack.c.bf16 %v968, %v964
    %v1113 = vpack.c.bf16 %v973, %v969
    %v1114 = vpack.c.bf16 %v974, %v970
    %v1115 = vpack.c.bf16 %v975, %v971
    %v1116 = vpack.c.bf16 %v976, %v972
    %v1117 = vpack.c.bf16 %v981, %v977
    %v1118 = vpack.c.bf16 %v982, %v978
    %v1119 = vpack.c.bf16 %v983, %v979
    %v1120 = vpack.c.bf16 %v984, %v980
    %v1121 = vpack.c.bf16 %v989, %v985
    %v1122 = vpack.c.bf16 %v990, %v986
    %v1123 = vpack.c.bf16 %v991, %v987
    %v1124 = vpack.c.bf16 %v992, %v988
    %v1125 = vpack.c.bf16 %v997, %v993
    %v1126 = vpack.c.bf16 %v998, %v994
    %v1127 = vpack.c.bf16 %v999, %v995
    %v1128 = vpack.c.bf16 %v1000, %v996
    %v1129 = vpack.c.bf16 %v1005, %v1001
    %v1130 = vpack.c.bf16 %v1006, %v1002
    %v1131 = vpack.c.bf16 %v1007, %v1003
    %v1132 = vpack.c.bf16 %v1008, %v1004
    %v1133 = vpack.c.bf16 %v1013, %v1009
    %v1134 = vpack.c.bf16 %v1014, %v1010
    %v1135 = vpack.c.bf16 %v1015, %v1011
    %v1136 = vpack.c.bf16 %v1016, %v1012
    %v1137 = vpack.c.bf16 %v1021, %v1017
    %v1138 = vpack.c.bf16 %v1022, %v1018
    %v1139 = vpack.c.bf16 %v1023, %v1019
    %v1140 = vpack.c.bf16 %v1024, %v1020
    %v1141 = vpack.c.bf16 %v1029, %v1025
    %v1142 = vpack.c.bf16 %v1030, %v1026
    %v1143 = vpack.c.bf16 %v1031, %v1027
    %v1144 = vpack.c.bf16 %v1032, %v1028
    %v1145 = vpack.c.bf16 %v1037, %v1033
    %v1146 = vpack.c.bf16 %v1038, %v1034
    %v1147 = vpack.c.bf16 %v1039, %v1035
    %v1148 = vpack.c.bf16 %v1040, %v1036
    %v1149 = vpack.c.bf16 %v1045, %v1041
    %v1150 = vpack.c.bf16 %v1046, %v1042
    %v1151 = vpack.c.bf16 %v1047, %v1043
    %v1152 = vpack.c.bf16 %v1048, %v1044
    %v1153 = vpack.c.bf16 %v1053, %v1049
    %v1154 = vpack.c.bf16 %v1054, %v1050
    %v1155 = vpack.c.bf16 %v1055, %v1051
    %v1156 = vpack.c.bf16 %v1056, %v1052
    %v1157 = vpack.c.bf16 %v1061, %v1057
    %v1158 = vpack.c.bf16 %v1062, %v1058
    %v1159 = vpack.c.bf16 %v1063, %v1059
    %v1160 = vpack.c.bf16 %v1064, %v1060
    %v1161 = vld [vmem:[%s3] sm:$0xff]
    %v1162 = vld [vmem:[%s3 + $0x8] sm:$0xff]
    %v1163 = vld [vmem:[%s3 + $0x10] sm:$0xff]
    %v1164 = vld [vmem:[%s3 + $0x18] sm:$0xff]
    %v1165 = vld [vmem:[%s3 + $0x20] sm:$0xff]
    %v1166 = vld [vmem:[%s3 + $0x28] sm:$0xff]
    %v1167 = vld [vmem:[%s3 + $0x30] sm:$0xff]
    %v1168 = vld [vmem:[%s3 + $0x38] sm:$0xff]
    %v1169 = vld [vmem:[%s3 + $0x40] sm:$0xff]
    %v1170 = vld [vmem:[%s3 + $0x48] sm:$0xff]
    %v1171 = vld [vmem:[%s3 + $0x50] sm:$0xff]
    %v1172 = vld [vmem:[%s3 + $0x58] sm:$0xff]
    %v1173 = vld [vmem:[%s3 + $0x60] sm:$0xff]
    %v1174 = vld [vmem:[%s3 + $0x68] sm:$0xff]
    %v1175 = vld [vmem:[%s3 + $0x70] sm:$0xff]
    %v1176 = vld [vmem:[%s3 + $0x78] sm:$0xff]
    %v1177 = vld [vmem:[%s3 + $0x80] sm:$0xff]
    %v1178 = vld [vmem:[%s3 + $0x88] sm:$0xff]
    %v1179 = vld [vmem:[%s3 + $0x90] sm:$0xff]
    %v1180 = vld [vmem:[%s3 + $0x98] sm:$0xff]
    %v1181 = vld [vmem:[%s3 + $0xa0] sm:$0xff]
    %v1182 = vld [vmem:[%s3 + $0xa8] sm:$0xff]
    %v1183 = vld [vmem:[%s3 + $0xb0] sm:$0xff]
    %v1184 = vld [vmem:[%s3 + $0xb8] sm:$0xff]
    %v1185 = vld [vmem:[%s3 + $0xc0] sm:$0xff]
    %v1186 = vld [vmem:[%s3 + $0xc8] sm:$0xff]
    %v1187 = vld [vmem:[%s3 + $0xd0] sm:$0xff]
    %v1188 = vld [vmem:[%s3 + $0xd8] sm:$0xff]
    %v1189 = vld [vmem:[%s3 + $0xe0] sm:$0xff]
    %v1190 = vld [vmem:[%s3 + $0xe8] sm:$0xff]
    %v1191 = vld [vmem:[%s3 + $0xf0] sm:$0xff]
    %v1192 = vld [vmem:[%s3 + $0xf8] sm:$0xff]
    %v1193 = vld [vmem:[%s3 + $0x100] sm:$0xff]
    %v1194 = vld [vmem:[%s3 + $0x108] sm:$0xff]
    %v1195 = vld [vmem:[%s3 + $0x110] sm:$0xff]
    %v1196 = vld [vmem:[%s3 + $0x118] sm:$0xff]
    %v1197 = vld [vmem:[%s3 + $0x120] sm:$0xff]
    %v1198 = vld [vmem:[%s3 + $0x128] sm:$0xff]
    %v1199 = vld [vmem:[%s3 + $0x130] sm:$0xff]
    %v1200 = vld [vmem:[%s3 + $0x138] sm:$0xff]
    %v1201 = vld [vmem:[%s3 + $0x140] sm:$0xff]
    %v1202 = vld [vmem:[%s3 + $0x148] sm:$0xff]
    %v1203 = vld [vmem:[%s3 + $0x150] sm:$0xff]
    %v1204 = vld [vmem:[%s3 + $0x158] sm:$0xff]
    %v1205 = vld [vmem:[%s3 + $0x160] sm:$0xff]
    %v1206 = vld [vmem:[%s3 + $0x168] sm:$0xff]
    %v1207 = vld [vmem:[%s3 + $0x170] sm:$0xff]
    %v1208 = vld [vmem:[%s3 + $0x178] sm:$0xff]
    %v1209 = vld [vmem:[%s3 + $0x180] sm:$0xff]
    %v1210 = vld [vmem:[%s3 + $0x188] sm:$0xff]
    %v1211 = vld [vmem:[%s3 + $0x190] sm:$0xff]
    %v1212 = vld [vmem:[%s3 + $0x198] sm:$0xff]
    %v1213 = vld [vmem:[%s3 + $0x1a0] sm:$0xff]
    %v1214 = vld [vmem:[%s3 + $0x1a8] sm:$0xff]
    %v1215 = vld [vmem:[%s3 + $0x1b0] sm:$0xff]
    %v1216 = vld [vmem:[%s3 + $0x1b8] sm:$0xff]
    %v1217 = vld [vmem:[%s3 + $0x1c0] sm:$0xff]
    %v1218 = vld [vmem:[%s3 + $0x1c8] sm:$0xff]
    %v1219 = vld [vmem:[%s3 + $0x1d0] sm:$0xff]
    %v1220 = vld [vmem:[%s3 + $0x1d8] sm:$0xff]
    %v1221 = vld [vmem:[%s3 + $0x1e0] sm:$0xff]
    %v1222 = vld [vmem:[%s3 + $0x1e8] sm:$0xff]
    %v1223 = vld [vmem:[%s3 + $0x1f0] sm:$0xff]
    %v1224 = vld [vmem:[%s3 + $0x1f8] sm:$0xff]
    %v1225 = vld [vmem:[%s4] sm:$0x3]
    %v1227 = vlaneseq
    %v1228 = vshrl.u32 %v1227, 7
    %v1229 = vsub.s32 0, %v1228
    %v1230 = vrot.slane %v1225, %v1229
    %v1231 = vlaneseq
    %v1232 = vshrl.u32 %v1231, 7
    %v1233 = vsub.s32 1, %v1232
    %v1234 = vrot.slane %v1225, %v1233
    %v1301 = vunpack.c.l.b16 %v1161
    %v1302 = vunpack.c.h.b16 %v1161
    %v1303 = vunpack.c.l.b16 %v1162
    %v1304 = vunpack.c.h.b16 %v1162
    %v1305 = vunpack.c.l.b16 %v1163
    %v1306 = vunpack.c.h.b16 %v1163
    %v1307 = vunpack.c.l.b16 %v1164
    %v1308 = vunpack.c.h.b16 %v1164
    %v1309 = vunpack.c.l.b16 %v1165
    %v1310 = vunpack.c.h.b16 %v1165
    %v1311 = vunpack.c.l.b16 %v1166
    %v1312 = vunpack.c.h.b16 %v1166
    %v1313 = vunpack.c.l.b16 %v1167
    %v1314 = vunpack.c.h.b16 %v1167
    %v1315 = vunpack.c.l.b16 %v1168
    %v1316 = vunpack.c.h.b16 %v1168
    %v1317 = vunpack.c.l.b16 %v1169
    %v1318 = vunpack.c.h.b16 %v1169
    %v1319 = vunpack.c.l.b16 %v1170
    %v1320 = vunpack.c.h.b16 %v1170
    %v1321 = vunpack.c.l.b16 %v1171
    %v1322 = vunpack.c.h.b16 %v1171
    %v1323 = vunpack.c.l.b16 %v1172
    %v1324 = vunpack.c.h.b16 %v1172
    %v1325 = vunpack.c.l.b16 %v1173
    %v1326 = vunpack.c.h.b16 %v1173
    %v1327 = vunpack.c.l.b16 %v1174
    %v1328 = vunpack.c.h.b16 %v1174
    %v1329 = vunpack.c.l.b16 %v1175
    %v1330 = vunpack.c.h.b16 %v1175
    %v1331 = vunpack.c.l.b16 %v1176
    %v1332 = vunpack.c.h.b16 %v1176
    %v1333 = vunpack.c.l.b16 %v1177
    %v1334 = vunpack.c.h.b16 %v1177
    %v1335 = vunpack.c.l.b16 %v1178
    %v1336 = vunpack.c.h.b16 %v1178
    %v1337 = vunpack.c.l.b16 %v1179
    %v1338 = vunpack.c.h.b16 %v1179
    %v1339 = vunpack.c.l.b16 %v1180
    %v1340 = vunpack.c.h.b16 %v1180
    %v1341 = vunpack.c.l.b16 %v1181
    %v1342 = vunpack.c.h.b16 %v1181
    %v1343 = vunpack.c.l.b16 %v1182
    %v1344 = vunpack.c.h.b16 %v1182
    %v1345 = vunpack.c.l.b16 %v1183
    %v1346 = vunpack.c.h.b16 %v1183
    %v1347 = vunpack.c.l.b16 %v1184
    %v1348 = vunpack.c.h.b16 %v1184
    %v1349 = vunpack.c.l.b16 %v1185
    %v1350 = vunpack.c.h.b16 %v1185
    %v1351 = vunpack.c.l.b16 %v1186
    %v1352 = vunpack.c.h.b16 %v1186
    %v1353 = vunpack.c.l.b16 %v1187
    %v1354 = vunpack.c.h.b16 %v1187
    %v1355 = vunpack.c.l.b16 %v1188
    %v1356 = vunpack.c.h.b16 %v1188
    %v1357 = vunpack.c.l.b16 %v1189
    %v1358 = vunpack.c.h.b16 %v1189
    %v1359 = vunpack.c.l.b16 %v1190
    %v1360 = vunpack.c.h.b16 %v1190
    %v1361 = vunpack.c.l.b16 %v1191
    %v1362 = vunpack.c.h.b16 %v1191
    %v1363 = vunpack.c.l.b16 %v1192
    %v1364 = vunpack.c.h.b16 %v1192
    %v1365 = vunpack.c.l.b16 %v1193
    %v1366 = vunpack.c.h.b16 %v1193
    %v1367 = vunpack.c.l.b16 %v1194
    %v1368 = vunpack.c.h.b16 %v1194
    %v1369 = vunpack.c.l.b16 %v1195
    %v1370 = vunpack.c.h.b16 %v1195
    %v1371 = vunpack.c.l.b16 %v1196
    %v1372 = vunpack.c.h.b16 %v1196
    %v1373 = vunpack.c.l.b16 %v1197
    %v1374 = vunpack.c.h.b16 %v1197
    %v1375 = vunpack.c.l.b16 %v1198
    %v1376 = vunpack.c.h.b16 %v1198
    %v1377 = vunpack.c.l.b16 %v1199
    %v1378 = vunpack.c.h.b16 %v1199
    %v1379 = vunpack.c.l.b16 %v1200
    %v1380 = vunpack.c.h.b16 %v1200
    %v1381 = vunpack.c.l.b16 %v1201
    %v1382 = vunpack.c.h.b16 %v1201
    %v1383 = vunpack.c.l.b16 %v1202
    %v1384 = vunpack.c.h.b16 %v1202
    %v1385 = vunpack.c.l.b16 %v1203
    %v1386 = vunpack.c.h.b16 %v1203
    %v1387 = vunpack.c.l.b16 %v1204
    %v1388 = vunpack.c.h.b16 %v1204
    %v1389 = vunpack.c.l.b16 %v1205
    %v1390 = vunpack.c.h.b16 %v1205
    %v1391 = vunpack.c.l.b16 %v1206
    %v1392 = vunpack.c.h.b16 %v1206
    %v1393 = vunpack.c.l.b16 %v1207
    %v1394 = vunpack.c.h.b16 %v1207
    %v1395 = vunpack.c.l.b16 %v1208
    %v1396 = vunpack.c.h.b16 %v1208
    %v1397 = vunpack.c.l.b16 %v1209
    %v1398 = vunpack.c.h.b16 %v1209
    %v1399 = vunpack.c.l.b16 %v1210
    %v1400 = vunpack.c.h.b16 %v1210
    %v1401 = vunpack.c.l.b16 %v1211
    %v1402 = vunpack.c.h.b16 %v1211
    %v1403 = vunpack.c.l.b16 %v1212
    %v1404 = vunpack.c.h.b16 %v1212
    %v1405 = vunpack.c.l.b16 %v1213
    %v1406 = vunpack.c.h.b16 %v1213
    %v1407 = vunpack.c.l.b16 %v1214
    %v1408 = vunpack.c.h.b16 %v1214
    %v1409 = vunpack.c.l.b16 %v1215
    %v1410 = vunpack.c.h.b16 %v1215
    %v1411 = vunpack.c.l.b16 %v1216
    %v1412 = vunpack.c.h.b16 %v1216
    %v1413 = vunpack.c.l.b16 %v1217
    %v1414 = vunpack.c.h.b16 %v1217
    %v1415 = vunpack.c.l.b16 %v1218
    %v1416 = vunpack.c.h.b16 %v1218
    %v1417 = vunpack.c.l.b16 %v1219
    %v1418 = vunpack.c.h.b16 %v1219
    %v1419 = vunpack.c.l.b16 %v1220
    %v1420 = vunpack.c.h.b16 %v1220
    %v1421 = vunpack.c.l.b16 %v1221
    %v1422 = vunpack.c.h.b16 %v1221
    %v1423 = vunpack.c.l.b16 %v1222
    %v1424 = vunpack.c.h.b16 %v1222
    %v1425 = vunpack.c.l.b16 %v1223
    %v1426 = vunpack.c.h.b16 %v1223
    %v1427 = vunpack.c.l.b16 %v1224
    %v1428 = vunpack.c.h.b16 %v1224
    %v1429 = vpack.c.b16 %v1303, %v1301
    %v1430 = vpack.c.b16 %v1304, %v1302
    %v1431 = vpack.c.b16 %v1307, %v1305
    %v1432 = vpack.c.b16 %v1308, %v1306
    %v1433 = vpack.c.b16 %v1311, %v1309
    %v1434 = vpack.c.b16 %v1312, %v1310
    %v1435 = vpack.c.b16 %v1315, %v1313
    %v1436 = vpack.c.b16 %v1316, %v1314
    %v1437 = vpack.c.b16 %v1319, %v1317
    %v1438 = vpack.c.b16 %v1320, %v1318
    %v1439 = vpack.c.b16 %v1323, %v1321
    %v1440 = vpack.c.b16 %v1324, %v1322
    %v1441 = vpack.c.b16 %v1327, %v1325
    %v1442 = vpack.c.b16 %v1328, %v1326
    %v1443 = vpack.c.b16 %v1331, %v1329
    %v1444 = vpack.c.b16 %v1332, %v1330
    %v1445 = vpack.c.b16 %v1335, %v1333
    %v1446 = vpack.c.b16 %v1336, %v1334
    %v1447 = vpack.c.b16 %v1339, %v1337
    %v1448 = vpack.c.b16 %v1340, %v1338
    %v1449 = vpack.c.b16 %v1343, %v1341
    %v1450 = vpack.c.b16 %v1344, %v1342
    %v1451 = vpack.c.b16 %v1347, %v1345
    %v1452 = vpack.c.b16 %v1348, %v1346
    %v1453 = vpack.c.b16 %v1351, %v1349
    %v1454 = vpack.c.b16 %v1352, %v1350
    %v1455 = vpack.c.b16 %v1355, %v1353
    %v1456 = vpack.c.b16 %v1356, %v1354
    %v1457 = vpack.c.b16 %v1359, %v1357
    %v1458 = vpack.c.b16 %v1360, %v1358
    %v1459 = vpack.c.b16 %v1363, %v1361
    %v1460 = vpack.c.b16 %v1364, %v1362
    %v1461 = vpack.c.b16 %v1367, %v1365
    %v1462 = vpack.c.b16 %v1368, %v1366
    %v1463 = vpack.c.b16 %v1371, %v1369
    %v1464 = vpack.c.b16 %v1372, %v1370
    %v1465 = vpack.c.b16 %v1375, %v1373
    %v1466 = vpack.c.b16 %v1376, %v1374
    %v1467 = vpack.c.b16 %v1379, %v1377
    %v1468 = vpack.c.b16 %v1380, %v1378
    %v1469 = vpack.c.b16 %v1383, %v1381
    %v1470 = vpack.c.b16 %v1384, %v1382
    %v1471 = vpack.c.b16 %v1387, %v1385
    %v1472 = vpack.c.b16 %v1388, %v1386
    %v1473 = vpack.c.b16 %v1391, %v1389
    %v1474 = vpack.c.b16 %v1392, %v1390
    %v1475 = vpack.c.b16 %v1395, %v1393
    %v1476 = vpack.c.b16 %v1396, %v1394
    %v1477 = vpack.c.b16 %v1399, %v1397
    %v1478 = vpack.c.b16 %v1400, %v1398
    %v1479 = vpack.c.b16 %v1403, %v1401
    %v1480 = vpack.c.b16 %v1404, %v1402
    %v1481 = vpack.c.b16 %v1407, %v1405
    %v1482 = vpack.c.b16 %v1408, %v1406
    %v1483 = vpack.c.b16 %v1411, %v1409
    %v1484 = vpack.c.b16 %v1412, %v1410
    %v1485 = vpack.c.b16 %v1415, %v1413
    %v1486 = vpack.c.b16 %v1416, %v1414
    %v1487 = vpack.c.b16 %v1419, %v1417
    %v1488 = vpack.c.b16 %v1420, %v1418
    %v1489 = vpack.c.b16 %v1423, %v1421
    %v1490 = vpack.c.b16 %v1424, %v1422
    %v1491 = vpack.c.b16 %v1427, %v1425
    %v1492 = vpack.c.b16 %v1428, %v1426
    %1557 = vmatprep.subr.bf16.mxu0 %v1444
    %1558 = vmatpush1.bf16.msra.mxu0 %v1443
    %1559 = vmatprep.subr.bf16.mxu0 %v1442
    %1560 = vmatpush1.bf16.msra.mxu0 %v1441
    %1561 = vmatprep.subr.bf16.mxu0 %v1440
    %1562 = vmatpush1.bf16.msra.mxu0 %v1439
    %1563 = vmatprep.subr.bf16.mxu0 %v1438
    %1564 = vmatpush1.bf16.msra.mxu0 %v1437
    %1565 = vmatprep.subr.bf16.mxu0 %v1436
    %1566 = vmatpush1.bf16.msra.mxu0 %v1435
    %1567 = vmatprep.subr.bf16.mxu0 %v1434
    %1568 = vmatpush1.bf16.msra.mxu0 %v1433
    %1569 = vmatprep.subr.bf16.mxu0 %v1432
    %1570 = vmatpush1.bf16.msra.mxu0 %v1431
    %1571 = vmatprep.subr.bf16.mxu0 %v1430
    %1572 = vmatpush1.bf16.msra.mxu0 %v1429
    %1573 = vmatprep.subr.bf16.mxu0 %v1460
    %1574 = vmatpush2.bf16.msra.mxu0 %v1459
    %1575 = vmatprep.subr.bf16.mxu0 %v1458
    %1576 = vmatpush2.bf16.msra.mxu0 %v1457
    %1577 = vmatprep.subr.bf16.mxu0 %v1456
    %1578 = vmatpush2.bf16.msra.mxu0 %v1455
    %1579 = vmatprep.subr.bf16.mxu0 %v1454
    %1580 = vmatpush2.bf16.msra.mxu0 %v1453
    %1581 = vmatprep.subr.bf16.mxu0 %v1452
    %1582 = vmatpush2.bf16.msra.mxu0 %v1451
    %1583 = vmatprep.subr.bf16.mxu0 %v1450
    %1584 = vmatpush2.bf16.msra.mxu0 %v1449
    %1585 = vmatprep.subr.bf16.mxu0 %v1448
    %1586 = vmatpush2.bf16.msra.mxu0 %v1447
    %1587 = vmatprep.subr.bf16.mxu0 %v1446
    %1588 = vmatpush2.bf16.msra.mxu0 %v1445
    %1589 = vmatprep.mubr.bf16.mxu0 %v1066
    %1590 = vmatmul.mubr.bf16.gmra.mxu0 %v1065
    %v1591 = vpop.f32.mrf.mxu0
    %v1592 = vadd.f32 %v1230, %v1591
    %v1593 = vpop.f32.mrf.mxu0
    %v1594 = vadd.f32 %v1234, %v1593
    %v1595 = vpop.f32.mrf.mxu0
    %v1596 = vadd.f32 %v1230, %v1595
    %v1597 = vpop.f32.mrf.mxu0
    %v1598 = vadd.f32 %v1234, %v1597
    %1599 = vmatprep.mubr.bf16.mxu0 %v1070
    %1600 = vmatmul.mubr.bf16.gmra.mxu0 %v1069
    %v1601 = vpop.f32.mrf.mxu0
    %v1602 = vadd.f32 %v1230, %v1601
    %v1603 = vpop.f32.mrf.mxu0
    %v1604 = vadd.f32 %v1234, %v1603
    %v1605 = vpop.f32.mrf.mxu0
    %v1606 = vadd.f32 %v1230, %v1605
    %v1607 = vpop.f32.mrf.mxu0
    %v1608 = vadd.f32 %v1234, %v1607
    %1609 = vmatprep.mubr.bf16.mxu0 %v1074
    %1610 = vmatmul.mubr.bf16.gmra.mxu0 %v1073
    %v1611 = vpop.f32.mrf.mxu0
    %v1612 = vadd.f32 %v1230, %v1611
    %v1613 = vpop.f32.mrf.mxu0
    %v1614 = vadd.f32 %v1234, %v1613
    %v1615 = vpop.f32.mrf.mxu0
    %v1616 = vadd.f32 %v1230, %v1615
    %v1617 = vpop.f32.mrf.mxu0
    %v1618 = vadd.f32 %v1234, %v1617
    %1619 = vmatprep.mubr.bf16.mxu0 %v1078
    %1620 = vmatmul.mubr.bf16.gmra.mxu0 %v1077
    %v1621 = vpop.f32.mrf.mxu0
    %v1622 = vadd.f32 %v1230, %v1621
    %v1623 = vpop.f32.mrf.mxu0
    %v1624 = vadd.f32 %v1234, %v1623
    %v1625 = vpop.f32.mrf.mxu0
    %v1626 = vadd.f32 %v1230, %v1625
    %v1627 = vpop.f32.mrf.mxu0
    %v1628 = vadd.f32 %v1234, %v1627
    %1629 = vmatprep.mubr.bf16.mxu0 %v1082
    %1630 = vmatmul.mubr.bf16.gmra.mxu0 %v1081
    %v1631 = vpop.f32.mrf.mxu0
    %v1632 = vadd.f32 %v1230, %v1631
    %v1633 = vpop.f32.mrf.mxu0
    %v1634 = vadd.f32 %v1234, %v1633
    %v1635 = vpop.f32.mrf.mxu0
    %v1636 = vadd.f32 %v1230, %v1635
    %v1637 = vpop.f32.mrf.mxu0
    %v1638 = vadd.f32 %v1234, %v1637
    %1639 = vmatprep.mubr.bf16.mxu0 %v1086
    %1640 = vmatmul.mubr.bf16.gmra.mxu0 %v1085
    %v1641 = vpop.f32.mrf.mxu0
    %v1642 = vadd.f32 %v1230, %v1641
    %v1643 = vpop.f32.mrf.mxu0
    %v1644 = vadd.f32 %v1234, %v1643
    %v1645 = vpop.f32.mrf.mxu0
    %v1646 = vadd.f32 %v1230, %v1645
    %v1647 = vpop.f32.mrf.mxu0
    %v1648 = vadd.f32 %v1234, %v1647
    %1649 = vmatprep.mubr.bf16.mxu0 %v1090
    %1650 = vmatmul.mubr.bf16.gmra.mxu0 %v1089
    %v1651 = vpop.f32.mrf.mxu0
    %v1652 = vadd.f32 %v1230, %v1651
    %v1653 = vpop.f32.mrf.mxu0
    %v1654 = vadd.f32 %v1234, %v1653
    %v1655 = vpop.f32.mrf.mxu0
    %v1656 = vadd.f32 %v1230, %v1655
    %v1657 = vpop.f32.mrf.mxu0
    %v1658 = vadd.f32 %v1234, %v1657
    %1659 = vmatprep.mubr.bf16.mxu0 %v1094
    %1660 = vmatmul.mubr.bf16.gmra.mxu0 %v1093
    %v1661 = vpop.f32.mrf.mxu0
    %v1662 = vadd.f32 %v1230, %v1661
    %v1663 = vpop.f32.mrf.mxu0
    %v1664 = vadd.f32 %v1234, %v1663
    %v1665 = vpop.f32.mrf.mxu0
    %v1666 = vadd.f32 %v1230, %v1665
    %v1667 = vpop.f32.mrf.mxu0
    %v1668 = vadd.f32 %v1234, %v1667
    %1669 = vmatprep.mubr.bf16.mxu0 %v1098
    %1670 = vmatmul.mubr.bf16.gmra.mxu0 %v1097
    %v1671 = vpop.f32.mrf.mxu0
    %v1672 = vadd.f32 %v1230, %v1671
    %v1673 = vpop.f32.mrf.mxu0
    %v1674 = vadd.f32 %v1234, %v1673
    %v1675 = vpop.f32.mrf.mxu0
    %v1676 = vadd.f32 %v1230, %v1675
    %v1677 = vpop.f32.mrf.mxu0
    %v1678 = vadd.f32 %v1234, %v1677
    %1679 = vmatprep.mubr.bf16.mxu0 %v1102
    %1680 = vmatmul.mubr.bf16.gmra.mxu0 %v1101
    %v1681 = vpop.f32.mrf.mxu0
    %v1682 = vadd.f32 %v1230, %v1681
    %v1683 = vpop.f32.mrf.mxu0
    %v1684 = vadd.f32 %v1234, %v1683
    %v1685 = vpop.f32.mrf.mxu0
    %v1686 = vadd.f32 %v1230, %v1685
    %v1687 = vpop.f32.mrf.mxu0
    %v1688 = vadd.f32 %v1234, %v1687
    %1689 = vmatprep.mubr.bf16.mxu0 %v1106
    %1690 = vmatmul.mubr.bf16.gmra.mxu0 %v1105
    %v1691 = vpop.f32.mrf.mxu0
    %v1692 = vadd.f32 %v1230, %v1691
    %v1693 = vpop.f32.mrf.mxu0
    %v1694 = vadd.f32 %v1234, %v1693
    %v1695 = vpop.f32.mrf.mxu0
    %v1696 = vadd.f32 %v1230, %v1695
    %v1697 = vpop.f32.mrf.mxu0
    %v1698 = vadd.f32 %v1234, %v1697
    %1699 = vmatprep.mubr.bf16.mxu0 %v1110
    %1700 = vmatmul.mubr.bf16.gmra.mxu0 %v1109
    %v1701 = vpop.f32.mrf.mxu0
    %v1702 = vadd.f32 %v1230, %v1701
    %v1703 = vpop.f32.mrf.mxu0
    %v1704 = vadd.f32 %v1234, %v1703
    %v1705 = vpop.f32.mrf.mxu0
    %v1706 = vadd.f32 %v1230, %v1705
    %v1707 = vpop.f32.mrf.mxu0
    %v1708 = vadd.f32 %v1234, %v1707
    %1709 = vmatprep.mubr.bf16.mxu0 %v1114
    %1710 = vmatmul.mubr.bf16.gmra.mxu0 %v1113
    %v1711 = vpop.f32.mrf.mxu0
    %v1712 = vadd.f32 %v1230, %v1711
    %v1713 = vpop.f32.mrf.mxu0
    %v1714 = vadd.f32 %v1234, %v1713
    %v1715 = vpop.f32.mrf.mxu0
    %v1716 = vadd.f32 %v1230, %v1715
    %v1717 = vpop.f32.mrf.mxu0
    %v1718 = vadd.f32 %v1234, %v1717
    %1719 = vmatprep.mubr.bf16.mxu0 %v1118
    %1720 = vmatmul.mubr.bf16.gmra.mxu0 %v1117
    %v1721 = vpop.f32.mrf.mxu0
    %v1722 = vadd.f32 %v1230, %v1721
    %v1723 = vpop.f32.mrf.mxu0
    %v1724 = vadd.f32 %v1234, %v1723
    %v1725 = vpop.f32.mrf.mxu0
    %v1726 = vadd.f32 %v1230, %v1725
    %v1727 = vpop.f32.mrf.mxu0
    %v1728 = vadd.f32 %v1234, %v1727
    %1729 = vmatprep.mubr.bf16.mxu0 %v1122
    %1730 = vmatmul.mubr.bf16.gmra.mxu0 %v1121
    %v1731 = vpop.f32.mrf.mxu0
    %v1732 = vadd.f32 %v1230, %v1731
    %v1733 = vpop.f32.mrf.mxu0
    %v1734 = vadd.f32 %v1234, %v1733
    %v1735 = vpop.f32.mrf.mxu0
    %v1736 = vadd.f32 %v1230, %v1735
    %v1737 = vpop.f32.mrf.mxu0
    %v1738 = vadd.f32 %v1234, %v1737
    %1739 = vmatprep.mubr.bf16.mxu0 %v1126
    %1740 = vmatmul.mubr.bf16.gmra.mxu0 %v1125
    %v1741 = vpop.f32.mrf.mxu0
    %v1742 = vadd.f32 %v1230, %v1741
    %v1743 = vpop.f32.mrf.mxu0
    %v1744 = vadd.f32 %v1234, %v1743
    %v1745 = vpop.f32.mrf.mxu0
    %v1746 = vadd.f32 %v1230, %v1745
    %v1747 = vpop.f32.mrf.mxu0
    %v1748 = vadd.f32 %v1234, %v1747
    %1749 = vmatprep.mubr.bf16.mxu0 %v1130
    %1750 = vmatmul.mubr.bf16.gmra.mxu0 %v1129
    %v1751 = vpop.f32.mrf.mxu0
    %v1752 = vadd.f32 %v1230, %v1751
    %v1753 = vpop.f32.mrf.mxu0
    %v1754 = vadd.f32 %v1234, %v1753
    %v1755 = vpop.f32.mrf.mxu0
    %v1756 = vadd.f32 %v1230, %v1755
    %v1757 = vpop.f32.mrf.mxu0
    %v1758 = vadd.f32 %v1234, %v1757
    %1759 = vmatprep.mubr.bf16.mxu0 %v1134
    %1760 = vmatmul.mubr.bf16.gmra.mxu0 %v1133
    %v1761 = vpop.f32.mrf.mxu0
    %v1762 = vadd.f32 %v1230, %v1761
    %v1763 = vpop.f32.mrf.mxu0
    %v1764 = vadd.f32 %v1234, %v1763
    %v1765 = vpop.f32.mrf.mxu0
    %v1766 = vadd.f32 %v1230, %v1765
    %v1767 = vpop.f32.mrf.mxu0
    %v1768 = vadd.f32 %v1234, %v1767
    %1769 = vmatprep.mubr.bf16.mxu0 %v1138
    %1770 = vmatmul.mubr.bf16.gmra.mxu0 %v1137
    %v1771 = vpop.f32.mrf.mxu0
    %v1772 = vadd.f32 %v1230, %v1771
    %v1773 = vpop.f32.mrf.mxu0
    %v1774 = vadd.f32 %v1234, %v1773
    %v1775 = vpop.f32.mrf.mxu0
    %v1776 = vadd.f32 %v1230, %v1775
    %v1777 = vpop.f32.mrf.mxu0
    %v1778 = vadd.f32 %v1234, %v1777
    %1779 = vmatprep.mubr.bf16.mxu0 %v1142
    %1780 = vmatmul.mubr.bf16.gmra.mxu0 %v1141
    %v1781 = vpop.f32.mrf.mxu0
    %v1782 = vadd.f32 %v1230, %v1781
    %v1783 = vpop.f32.mrf.mxu0
    %v1784 = vadd.f32 %v1234, %v1783
    %v1785 = vpop.f32.mrf.mxu0
    %v1786 = vadd.f32 %v1230, %v1785
    %v1787 = vpop.f32.mrf.mxu0
    %v1788 = vadd.f32 %v1234, %v1787
    %1789 = vmatprep.mubr.bf16.mxu0 %v1146
    %1790 = vmatmul.mubr.bf16.gmra.mxu0 %v1145
    %v1791 = vpop.f32.mrf.mxu0
    %v1792 = vadd.f32 %v1230, %v1791
    %v1793 = vpop.f32.mrf.mxu0
    %v1794 = vadd.f32 %v1234, %v1793
    %v1795 = vpop.f32.mrf.mxu0
    %v1796 = vadd.f32 %v1230, %v1795
    %v1797 = vpop.f32.mrf.mxu0
    %v1798 = vadd.f32 %v1234, %v1797
    %1799 = vmatprep.mubr.bf16.mxu0 %v1150
    %1800 = vmatmul.mubr.bf16.gmra.mxu0 %v1149
    %v1801 = vpop.f32.mrf.mxu0
    %v1802 = vadd.f32 %v1230, %v1801
    %v1803 = vpop.f32.mrf.mxu0
    %v1804 = vadd.f32 %v1234, %v1803
    %v1805 = vpop.f32.mrf.mxu0
    %v1806 = vadd.f32 %v1230, %v1805
    %v1807 = vpop.f32.mrf.mxu0
    %v1808 = vadd.f32 %v1234, %v1807
    %1809 = vmatprep.mubr.bf16.mxu0 %v1154
    %1810 = vmatmul.mubr.bf16.gmra.mxu0 %v1153
    %v1811 = vpop.f32.mrf.mxu0
    %v1812 = vadd.f32 %v1230, %v1811
    %v1813 = vpop.f32.mrf.mxu0
    %v1814 = vadd.f32 %v1234, %v1813
    %v1815 = vpop.f32.mrf.mxu0
    %v1816 = vadd.f32 %v1230, %v1815
    %v1817 = vpop.f32.mrf.mxu0
    %v1818 = vadd.f32 %v1234, %v1817
    %1819 = vmatprep.mubr.bf16.mxu0 %v1158
    %1820 = vmatmul.mubr.bf16.gmra.mxu0 %v1157
    %v1821 = vpop.f32.mrf.mxu0
    %v1822 = vadd.f32 %v1230, %v1821
    %v1823 = vpop.f32.mrf.mxu0
    %v1824 = vadd.f32 %v1234, %v1823
    %v1825 = vpop.f32.mrf.mxu0
    %v1826 = vadd.f32 %v1230, %v1825
    %v1827 = vpop.f32.mrf.mxu0
    %v1828 = vadd.f32 %v1234, %v1827
    %1829 = vdwg.mxu0
    %1830 = vmatprep.subr.bf16.mxu0 %v1476
    %1831 = vmatpush1.bf16.msra.mxu0 %v1475
    %1832 = vmatprep.subr.bf16.mxu0 %v1474
    %1833 = vmatpush1.bf16.msra.mxu0 %v1473
    %1834 = vmatprep.subr.bf16.mxu0 %v1472
    %1835 = vmatpush1.bf16.msra.mxu0 %v1471
    %1836 = vmatprep.subr.bf16.mxu0 %v1470
    %1837 = vmatpush1.bf16.msra.mxu0 %v1469
    %1838 = vmatprep.subr.bf16.mxu0 %v1468
    %1839 = vmatpush1.bf16.msra.mxu0 %v1467
    %1840 = vmatprep.subr.bf16.mxu0 %v1466
    %1841 = vmatpush1.bf16.msra.mxu0 %v1465
    %1842 = vmatprep.subr.bf16.mxu0 %v1464
    %1843 = vmatpush1.bf16.msra.mxu0 %v1463
    %1844 = vmatprep.subr.bf16.mxu0 %v1462
    %1845 = vmatpush1.bf16.msra.mxu0 %v1461
    %1846 = vmatprep.subr.bf16.mxu0 %v1492
    %1847 = vmatpush2.bf16.msra.mxu0 %v1491
    %1848 = vmatprep.subr.bf16.mxu0 %v1490
    %1849 = vmatpush2.bf16.msra.mxu0 %v1489
    %1850 = vmatprep.subr.bf16.mxu0 %v1488
    %1851 = vmatpush2.bf16.msra.mxu0 %v1487
    %1852 = vmatprep.subr.bf16.mxu0 %v1486
    %1853 = vmatpush2.bf16.msra.mxu0 %v1485
    %1854 = vmatprep.subr.bf16.mxu0 %v1484
    %1855 = vmatpush2.bf16.msra.mxu0 %v1483
    %1856 = vmatprep.subr.bf16.mxu0 %v1482
    %1857 = vmatpush2.bf16.msra.mxu0 %v1481
    %1858 = vmatprep.subr.bf16.mxu0 %v1480
    %1859 = vmatpush2.bf16.msra.mxu0 %v1479
    %1860 = vmatprep.subr.bf16.mxu0 %v1478
    %1861 = vmatpush2.bf16.msra.mxu0 %v1477
    %1862 = vmatprep.mubr.bf16.mxu0 %v1068
    %1863 = vmatmul.mubr.bf16.gmra.mxu0 %v1067
    %v1864 = vpop.f32.mrf.mxu0
    %v1865 = vadd.f32 %v1592, %v1864
    %v1866 = vpop.f32.mrf.mxu0
    %v1867 = vadd.f32 %v1594, %v1866
    %v1868 = vpop.f32.mrf.mxu0
    %v1869 = vadd.f32 %v1596, %v1868
    %v1870 = vpop.f32.mrf.mxu0
    %v1871 = vadd.f32 %v1598, %v1870
    %1872 = vmatprep.mubr.bf16.mxu0 %v1072
    %1873 = vmatmul.mubr.bf16.gmra.mxu0 %v1071
    %v1874 = vpop.f32.mrf.mxu0
    %v1875 = vadd.f32 %v1602, %v1874
    %v1876 = vpop.f32.mrf.mxu0
    %v1877 = vadd.f32 %v1604, %v1876
    %v1878 = vpop.f32.mrf.mxu0
    %v1879 = vadd.f32 %v1606, %v1878
    %v1880 = vpop.f32.mrf.mxu0
    %v1881 = vadd.f32 %v1608, %v1880
    %1882 = vmatprep.mubr.bf16.mxu0 %v1076
    %1883 = vmatmul.mubr.bf16.gmra.mxu0 %v1075
    %v1884 = vpop.f32.mrf.mxu0
    %v1885 = vadd.f32 %v1612, %v1884
    %v1886 = vpop.f32.mrf.mxu0
    %v1887 = vadd.f32 %v1614, %v1886
    %v1888 = vpop.f32.mrf.mxu0
    %v1889 = vadd.f32 %v1616, %v1888
    %v1890 = vpop.f32.mrf.mxu0
    %v1891 = vadd.f32 %v1618, %v1890
    %1892 = vmatprep.mubr.bf16.mxu0 %v1080
    %1893 = vmatmul.mubr.bf16.gmra.mxu0 %v1079
    %v1894 = vpop.f32.mrf.mxu0
    %v1895 = vadd.f32 %v1622, %v1894
    %v1896 = vpop.f32.mrf.mxu0
    %v1897 = vadd.f32 %v1624, %v1896
    %v1898 = vpop.f32.mrf.mxu0
    %v1899 = vadd.f32 %v1626, %v1898
    %v1900 = vpop.f32.mrf.mxu0
    %v1901 = vadd.f32 %v1628, %v1900
    %1902 = vmatprep.mubr.bf16.mxu0 %v1084
    %1903 = vmatmul.mubr.bf16.gmra.mxu0 %v1083
    %v1904 = vpop.f32.mrf.mxu0
    %v1905 = vadd.f32 %v1632, %v1904
    %v1906 = vpop.f32.mrf.mxu0
    %v1907 = vadd.f32 %v1634, %v1906
    %v1908 = vpop.f32.mrf.mxu0
    %v1909 = vadd.f32 %v1636, %v1908
    %v1910 = vpop.f32.mrf.mxu0
    %v1911 = vadd.f32 %v1638, %v1910
    %1912 = vmatprep.mubr.bf16.mxu0 %v1088
    %1913 = vmatmul.mubr.bf16.gmra.mxu0 %v1087
    %v1914 = vpop.f32.mrf.mxu0
    %v1915 = vadd.f32 %v1642, %v1914
    %v1916 = vpop.f32.mrf.mxu0
    %v1917 = vadd.f32 %v1644, %v1916
    %v1918 = vpop.f32.mrf.mxu0
    %v1919 = vadd.f32 %v1646, %v1918
    %v1920 = vpop.f32.mrf.mxu0
    %v1921 = vadd.f32 %v1648, %v1920
    %1922 = vmatprep.mubr.bf16.mxu0 %v1092
    %1923 = vmatmul.mubr.bf16.gmra.mxu0 %v1091
    %v1924 = vpop.f32.mrf.mxu0
    %v1925 = vadd.f32 %v1652, %v1924
    %v1926 = vpop.f32.mrf.mxu0
    %v1927 = vadd.f32 %v1654, %v1926
    %v1928 = vpop.f32.mrf.mxu0
    %v1929 = vadd.f32 %v1656, %v1928
    %v1930 = vpop.f32.mrf.mxu0
    %v1931 = vadd.f32 %v1658, %v1930
    %1932 = vmatprep.mubr.bf16.mxu0 %v1096
    %1933 = vmatmul.mubr.bf16.gmra.mxu0 %v1095
    %v1934 = vpop.f32.mrf.mxu0
    %v1935 = vadd.f32 %v1662, %v1934
    %v1936 = vpop.f32.mrf.mxu0
    %v1937 = vadd.f32 %v1664, %v1936
    %v1938 = vpop.f32.mrf.mxu0
    %v1939 = vadd.f32 %v1666, %v1938
    %v1940 = vpop.f32.mrf.mxu0
    %v1941 = vadd.f32 %v1668, %v1940
    %1942 = vmatprep.mubr.bf16.mxu0 %v1100
    %1943 = vmatmul.mubr.bf16.gmra.mxu0 %v1099
    %v1944 = vpop.f32.mrf.mxu0
    %v1945 = vadd.f32 %v1672, %v1944
    %v1946 = vpop.f32.mrf.mxu0
    %v1947 = vadd.f32 %v1674, %v1946
    %v1948 = vpop.f32.mrf.mxu0
    %v1949 = vadd.f32 %v1676, %v1948
    %v1950 = vpop.f32.mrf.mxu0
    %v1951 = vadd.f32 %v1678, %v1950
    %1952 = vmatprep.mubr.bf16.mxu0 %v1104
    %1953 = vmatmul.mubr.bf16.gmra.mxu0 %v1103
    %v1954 = vpop.f32.mrf.mxu0
    %v1955 = vadd.f32 %v1682, %v1954
    %v1956 = vpop.f32.mrf.mxu0
    %v1957 = vadd.f32 %v1684, %v1956
    %v1958 = vpop.f32.mrf.mxu0
    %v1959 = vadd.f32 %v1686, %v1958
    %v1960 = vpop.f32.mrf.mxu0
    %v1961 = vadd.f32 %v1688, %v1960
    %1962 = vmatprep.mubr.bf16.mxu0 %v1108
    %1963 = vmatmul.mubr.bf16.gmra.mxu0 %v1107
    %v1964 = vpop.f32.mrf.mxu0
    %v1965 = vadd.f32 %v1692, %v1964
    %v1966 = vpop.f32.mrf.mxu0
    %v1967 = vadd.f32 %v1694, %v1966
    %v1968 = vpop.f32.mrf.mxu0
    %v1969 = vadd.f32 %v1696, %v1968
    %v1970 = vpop.f32.mrf.mxu0
    %v1971 = vadd.f32 %v1698, %v1970
    %1972 = vmatprep.mubr.bf16.mxu0 %v1112
    %1973 = vmatmul.mubr.bf16.gmra.mxu0 %v1111
    %v1974 = vpop.f32.mrf.mxu0
    %v1975 = vadd.f32 %v1702, %v1974
    %v1976 = vpop.f32.mrf.mxu0
    %v1977 = vadd.f32 %v1704, %v1976
    %v1978 = vpop.f32.mrf.mxu0
    %v1979 = vadd.f32 %v1706, %v1978
    %v1980 = vpop.f32.mrf.mxu0
    %v1981 = vadd.f32 %v1708, %v1980
    %1982 = vmatprep.mubr.bf16.mxu0 %v1116
    %1983 = vmatmul.mubr.bf16.gmra.mxu0 %v1115
    %v1984 = vpop.f32.mrf.mxu0
    %v1985 = vadd.f32 %v1712, %v1984
    %v1986 = vpop.f32.mrf.mxu0
    %v1987 = vadd.f32 %v1714, %v1986
    %v1988 = vpop.f32.mrf.mxu0
    %v1989 = vadd.f32 %v1716, %v1988
    %v1990 = vpop.f32.mrf.mxu0
    %v1991 = vadd.f32 %v1718, %v1990
    %1992 = vmatprep.mubr.bf16.mxu0 %v1120
    %1993 = vmatmul.mubr.bf16.gmra.mxu0 %v1119
    %v1994 = vpop.f32.mrf.mxu0
    %v1995 = vadd.f32 %v1722, %v1994
    %v1996 = vpop.f32.mrf.mxu0
    %v1997 = vadd.f32 %v1724, %v1996
    %v1998 = vpop.f32.mrf.mxu0
    %v1999 = vadd.f32 %v1726, %v1998
    %v2000 = vpop.f32.mrf.mxu0
    %v2001 = vadd.f32 %v1728, %v2000
    %2002 = vmatprep.mubr.bf16.mxu0 %v1124
    %2003 = vmatmul.mubr.bf16.gmra.mxu0 %v1123
    %v2004 = vpop.f32.mrf.mxu0
    %v2005 = vadd.f32 %v1732, %v2004
    %v2006 = vpop.f32.mrf.mxu0
    %v2007 = vadd.f32 %v1734, %v2006
    %v2008 = vpop.f32.mrf.mxu0
    %v2009 = vadd.f32 %v1736, %v2008
    %v2010 = vpop.f32.mrf.mxu0
    %v2011 = vadd.f32 %v1738, %v2010
    %2012 = vmatprep.mubr.bf16.mxu0 %v1128
    %2013 = vmatmul.mubr.bf16.gmra.mxu0 %v1127
    %v2014 = vpop.f32.mrf.mxu0
    %v2015 = vadd.f32 %v1742, %v2014
    %v2016 = vpop.f32.mrf.mxu0
    %v2017 = vadd.f32 %v1744, %v2016
    %v2018 = vpop.f32.mrf.mxu0
    %v2019 = vadd.f32 %v1746, %v2018
    %v2020 = vpop.f32.mrf.mxu0
    %v2021 = vadd.f32 %v1748, %v2020
    %2022 = vmatprep.mubr.bf16.mxu0 %v1132
    %2023 = vmatmul.mubr.bf16.gmra.mxu0 %v1131
    %v2024 = vpop.f32.mrf.mxu0
    %v2025 = vadd.f32 %v1752, %v2024
    %v2026 = vpop.f32.mrf.mxu0
    %v2027 = vadd.f32 %v1754, %v2026
    %v2028 = vpop.f32.mrf.mxu0
    %v2029 = vadd.f32 %v1756, %v2028
    %v2030 = vpop.f32.mrf.mxu0
    %v2031 = vadd.f32 %v1758, %v2030
    %2032 = vmatprep.mubr.bf16.mxu0 %v1136
    %2033 = vmatmul.mubr.bf16.gmra.mxu0 %v1135
    %v2034 = vpop.f32.mrf.mxu0
    %v2035 = vadd.f32 %v1762, %v2034
    %v2036 = vpop.f32.mrf.mxu0
    %v2037 = vadd.f32 %v1764, %v2036
    %v2038 = vpop.f32.mrf.mxu0
    %v2039 = vadd.f32 %v1766, %v2038
    %v2040 = vpop.f32.mrf.mxu0
    %v2041 = vadd.f32 %v1768, %v2040
    %2042 = vmatprep.mubr.bf16.mxu0 %v1140
    %2043 = vmatmul.mubr.bf16.gmra.mxu0 %v1139
    %v2044 = vpop.f32.mrf.mxu0
    %v2045 = vadd.f32 %v1772, %v2044
    %v2046 = vpop.f32.mrf.mxu0
    %v2047 = vadd.f32 %v1774, %v2046
    %v2048 = vpop.f32.mrf.mxu0
    %v2049 = vadd.f32 %v1776, %v2048
    %v2050 = vpop.f32.mrf.mxu0
    %v2051 = vadd.f32 %v1778, %v2050
    %2052 = vmatprep.mubr.bf16.mxu0 %v1144
    %2053 = vmatmul.mubr.bf16.gmra.mxu0 %v1143
    %v2054 = vpop.f32.mrf.mxu0
    %v2055 = vadd.f32 %v1782, %v2054
    %v2056 = vpop.f32.mrf.mxu0
    %v2057 = vadd.f32 %v1784, %v2056
    %v2058 = vpop.f32.mrf.mxu0
    %v2059 = vadd.f32 %v1786, %v2058
    %v2060 = vpop.f32.mrf.mxu0
    %v2061 = vadd.f32 %v1788, %v2060
    %2062 = vmatprep.mubr.bf16.mxu0 %v1148
    %2063 = vmatmul.mubr.bf16.gmra.mxu0 %v1147
    %v2064 = vpop.f32.mrf.mxu0
    %v2065 = vadd.f32 %v1792, %v2064
    %v2066 = vpop.f32.mrf.mxu0
    %v2067 = vadd.f32 %v1794, %v2066
    %v2068 = vpop.f32.mrf.mxu0
    %v2069 = vadd.f32 %v1796, %v2068
    %v2070 = vpop.f32.mrf.mxu0
    %v2071 = vadd.f32 %v1798, %v2070
    %2072 = vmatprep.mubr.bf16.mxu0 %v1152
    %2073 = vmatmul.mubr.bf16.gmra.mxu0 %v1151
    %v2074 = vpop.f32.mrf.mxu0
    %v2075 = vadd.f32 %v1802, %v2074
    %v2076 = vpop.f32.mrf.mxu0
    %v2077 = vadd.f32 %v1804, %v2076
    %v2078 = vpop.f32.mrf.mxu0
    %v2079 = vadd.f32 %v1806, %v2078
    %v2080 = vpop.f32.mrf.mxu0
    %v2081 = vadd.f32 %v1808, %v2080
    %2082 = vmatprep.mubr.bf16.mxu0 %v1156
    %2083 = vmatmul.mubr.bf16.gmra.mxu0 %v1155
    %v2084 = vpop.f32.mrf.mxu0
    %v2085 = vadd.f32 %v1812, %v2084
    %v2086 = vpop.f32.mrf.mxu0
    %v2087 = vadd.f32 %v1814, %v2086
    %v2088 = vpop.f32.mrf.mxu0
    %v2089 = vadd.f32 %v1816, %v2088
    %v2090 = vpop.f32.mrf.mxu0
    %v2091 = vadd.f32 %v1818, %v2090
    %2092 = vmatprep.mubr.bf16.mxu0 %v1160
    %2093 = vmatmul.mubr.bf16.gmra.mxu0 %v1159
    %v2094 = vpop.f32.mrf.mxu0
    %v2095 = vadd.f32 %v1822, %v2094
    %v2096 = vpop.f32.mrf.mxu0
    %v2097 = vadd.f32 %v1824, %v2096
    %v2098 = vpop.f32.mrf.mxu0
    %v2099 = vadd.f32 %v1826, %v2098
    %v2100 = vpop.f32.mrf.mxu0
    %v2101 = vadd.f32 %v1828, %v2100
    %2102 = vdwg.mxu0
    %v2103 = vmax.f32 %v1865, 0.0
    %v2104 = vmax.f32 %v1867, 0.0
    %v2105 = vmax.f32 %v1869, 0.0
    %v2106 = vmax.f32 %v1871, 0.0
    %v2107 = vmax.f32 %v1875, 0.0
    %v2108 = vmax.f32 %v1877, 0.0
    %v2109 = vmax.f32 %v1879, 0.0
    %v2110 = vmax.f32 %v1881, 0.0
    %v2111 = vmax.f32 %v1885, 0.0
    %v2112 = vmax.f32 %v1887, 0.0
    %v2113 = vmax.f32 %v1889, 0.0
    %v2114 = vmax.f32 %v1891, 0.0
    %v2115 = vmax.f32 %v1895, 0.0
    %v2116 = vmax.f32 %v1897, 0.0
    %v2117 = vmax.f32 %v1899, 0.0
    %v2118 = vmax.f32 %v1901, 0.0
    %v2119 = vmax.f32 %v1905, 0.0
    %v2120 = vmax.f32 %v1907, 0.0
    %v2121 = vmax.f32 %v1909, 0.0
    %v2122 = vmax.f32 %v1911, 0.0
    %v2123 = vmax.f32 %v1915, 0.0
    %v2124 = vmax.f32 %v1917, 0.0
    %v2125 = vmax.f32 %v1919, 0.0
    %v2126 = vmax.f32 %v1921, 0.0
    %v2127 = vmax.f32 %v1925, 0.0
    %v2128 = vmax.f32 %v1927, 0.0
    %v2129 = vmax.f32 %v1929, 0.0
    %v2130 = vmax.f32 %v1931, 0.0
    %v2131 = vmax.f32 %v1935, 0.0
    %v2132 = vmax.f32 %v1937, 0.0
    %v2133 = vmax.f32 %v1939, 0.0
    %v2134 = vmax.f32 %v1941, 0.0
    %v2135 = vmax.f32 %v1945, 0.0
    %v2136 = vmax.f32 %v1947, 0.0
    %v2137 = vmax.f32 %v1949, 0.0
    %v2138 = vmax.f32 %v1951, 0.0
    %v2139 = vmax.f32 %v1955, 0.0
    %v2140 = vmax.f32 %v1957, 0.0
    %v2141 = vmax.f32 %v1959, 0.0
    %v2142 = vmax.f32 %v1961, 0.0
    %v2143 = vmax.f32 %v1965, 0.0
    %v2144 = vmax.f32 %v1967, 0.0
    %v2145 = vmax.f32 %v1969, 0.0
    %v2146 = vmax.f32 %v1971, 0.0
    %v2147 = vmax.f32 %v1975, 0.0
    %v2148 = vmax.f32 %v1977, 0.0
    %v2149 = vmax.f32 %v1979, 0.0
    %v2150 = vmax.f32 %v1981, 0.0
    %v2151 = vmax.f32 %v1985, 0.0
    %v2152 = vmax.f32 %v1987, 0.0
    %v2153 = vmax.f32 %v1989, 0.0
    %v2154 = vmax.f32 %v1991, 0.0
    %v2155 = vmax.f32 %v1995, 0.0
    %v2156 = vmax.f32 %v1997, 0.0
    %v2157 = vmax.f32 %v1999, 0.0
    %v2158 = vmax.f32 %v2001, 0.0
    %v2159 = vmax.f32 %v2005, 0.0
    %v2160 = vmax.f32 %v2007, 0.0
    %v2161 = vmax.f32 %v2009, 0.0
    %v2162 = vmax.f32 %v2011, 0.0
    %v2163 = vmax.f32 %v2015, 0.0
    %v2164 = vmax.f32 %v2017, 0.0
    %v2165 = vmax.f32 %v2019, 0.0
    %v2166 = vmax.f32 %v2021, 0.0
    %v2167 = vmax.f32 %v2025, 0.0
    %v2168 = vmax.f32 %v2027, 0.0
    %v2169 = vmax.f32 %v2029, 0.0
    %v2170 = vmax.f32 %v2031, 0.0
    %v2171 = vmax.f32 %v2035, 0.0
    %v2172 = vmax.f32 %v2037, 0.0
    %v2173 = vmax.f32 %v2039, 0.0
    %v2174 = vmax.f32 %v2041, 0.0
    %v2175 = vmax.f32 %v2045, 0.0
    %v2176 = vmax.f32 %v2047, 0.0
    %v2177 = vmax.f32 %v2049, 0.0
    %v2178 = vmax.f32 %v2051, 0.0
    %v2179 = vmax.f32 %v2055, 0.0
    %v2180 = vmax.f32 %v2057, 0.0
    %v2181 = vmax.f32 %v2059, 0.0
    %v2182 = vmax.f32 %v2061, 0.0
    %v2183 = vmax.f32 %v2065, 0.0
    %v2184 = vmax.f32 %v2067, 0.0
    %v2185 = vmax.f32 %v2069, 0.0
    %v2186 = vmax.f32 %v2071, 0.0
    %v2187 = vmax.f32 %v2075, 0.0
    %v2188 = vmax.f32 %v2077, 0.0
    %v2189 = vmax.f32 %v2079, 0.0
    %v2190 = vmax.f32 %v2081, 0.0
    %v2191 = vmax.f32 %v2085, 0.0
    %v2192 = vmax.f32 %v2087, 0.0
    %v2193 = vmax.f32 %v2089, 0.0
    %v2194 = vmax.f32 %v2091, 0.0
    %v2195 = vmax.f32 %v2095, 0.0
    %v2196 = vmax.f32 %v2097, 0.0
    %v2197 = vmax.f32 %v2099, 0.0
    %v2198 = vmax.f32 %v2101, 0.0
    %v2199 = vpack.c.bf16 %v2105, %v2103
    %v2200 = vpack.c.bf16 %v2106, %v2104
    %v2201 = vpack.c.bf16 %v2109, %v2107
    %v2202 = vpack.c.bf16 %v2110, %v2108
    %v2203 = vpack.c.bf16 %v2113, %v2111
    %v2204 = vpack.c.bf16 %v2114, %v2112
    %v2205 = vpack.c.bf16 %v2117, %v2115
    %v2206 = vpack.c.bf16 %v2118, %v2116
    %v2207 = vpack.c.bf16 %v2121, %v2119
    %v2208 = vpack.c.bf16 %v2122, %v2120
    %v2209 = vpack.c.bf16 %v2125, %v2123
    %v2210 = vpack.c.bf16 %v2126, %v2124
    %v2211 = vpack.c.bf16 %v2129, %v2127
    %v2212 = vpack.c.bf16 %v2130, %v2128
    %v2213 = vpack.c.bf16 %v2133, %v2131
    %v2214 = vpack.c.bf16 %v2134, %v2132
    %v2215 = vpack.c.bf16 %v2137, %v2135
    %v2216 = vpack.c.bf16 %v2138, %v2136
    %v2217 = vpack.c.bf16 %v2141, %v2139
    %v2218 = vpack.c.bf16 %v2142, %v2140
    %v2219 = vpack.c.bf16 %v2145, %v2143
    %v2220 = vpack.c.bf16 %v2146, %v2144
    %v2221 = vpack.c.bf16 %v2149, %v2147
    %v2222 = vpack.c.bf16 %v2150, %v2148
    %v2223 = vpack.c.bf16 %v2153, %v2151
    %v2224 = vpack.c.bf16 %v2154, %v2152
    %v2225 = vpack.c.bf16 %v2157, %v2155
    %v2226 = vpack.c.bf16 %v2158, %v2156
    %v2227 = vpack.c.bf16 %v2161, %v2159
    %v2228 = vpack.c.bf16 %v2162, %v2160
    %v2229 = vpack.c.bf16 %v2165, %v2163
    %v2230 = vpack.c.bf16 %v2166, %v2164
    %v2231 = vpack.c.bf16 %v2169, %v2167
    %v2232 = vpack.c.bf16 %v2170, %v2168
    %v2233 = vpack.c.bf16 %v2173, %v2171
    %v2234 = vpack.c.bf16 %v2174, %v2172
    %v2235 = vpack.c.bf16 %v2177, %v2175
    %v2236 = vpack.c.bf16 %v2178, %v2176
    %v2237 = vpack.c.bf16 %v2181, %v2179
    %v2238 = vpack.c.bf16 %v2182, %v2180
    %v2239 = vpack.c.bf16 %v2185, %v2183
    %v2240 = vpack.c.bf16 %v2186, %v2184
    %v2241 = vpack.c.bf16 %v2189, %v2187
    %v2242 = vpack.c.bf16 %v2190, %v2188
    %v2243 = vpack.c.bf16 %v2193, %v2191
    %v2244 = vpack.c.bf16 %v2194, %v2192
    %v2245 = vpack.c.bf16 %v2197, %v2195
    %v2246 = vpack.c.bf16 %v2198, %v2196
    %v2247 = vld [vmem:[#allocation6] sm:$0xf]
    %v2248 = vld [vmem:[#allocation6 + $0x4] sm:$0xf]
    %v2249 = vld [vmem:[#allocation6 + $0x8] sm:$0xf]
    %v2250 = vld [vmem:[#allocation6 + $0xc] sm:$0xf]
    %v2251 = vld [vmem:[#allocation6 + $0x10] sm:$0xf]
    %v2252 = vld [vmem:[#allocation6 + $0x14] sm:$0xf]
    %v2253 = vld [vmem:[#allocation6 + $0x18] sm:$0xf]
    %v2254 = vld [vmem:[#allocation6 + $0x1c] sm:$0xf]
    %v2255 = vld [vmem:[#allocation6 + $0x20] sm:$0xf]
    %v2256 = vld [vmem:[#allocation6 + $0x24] sm:$0xf]
    %v2257 = vld [vmem:[#allocation6 + $0x28] sm:$0xf]
    %v2258 = vld [vmem:[#allocation6 + $0x2c] sm:$0xf]
    %v2259 = vld [vmem:[#allocation6 + $0x30] sm:$0xf]
    %v2260 = vld [vmem:[#allocation6 + $0x34] sm:$0xf]
    %v2261 = vld [vmem:[#allocation6 + $0x38] sm:$0xf]
    %v2262 = vld [vmem:[#allocation6 + $0x3c] sm:$0xf]
    %v2263 = vld [vmem:[#allocation6 + $0x40] sm:$0xf]
    %v2264 = vld [vmem:[#allocation6 + $0x44] sm:$0xf]
    %v2265 = vld [vmem:[#allocation6 + $0x48] sm:$0xf]
    %v2266 = vld [vmem:[#allocation6 + $0x4c] sm:$0xf]
    %v2267 = vld [vmem:[#allocation6 + $0x50] sm:$0xf]
    %v2268 = vld [vmem:[#allocation6 + $0x54] sm:$0xf]
    %v2269 = vld [vmem:[#allocation6 + $0x58] sm:$0xf]
    %v2270 = vld [vmem:[#allocation6 + $0x5c] sm:$0xf]
    %v2271 = vld [vmem:[#allocation6 + $0x60] sm:$0xf]
    %v2272 = vld [vmem:[#allocation6 + $0x64] sm:$0xf]
    %v2273 = vld [vmem:[#allocation6 + $0x68] sm:$0xf]
    %v2274 = vld [vmem:[#allocation6 + $0x6c] sm:$0xf]
    %v2275 = vld [vmem:[#allocation6 + $0x70] sm:$0xf]
    %v2276 = vld [vmem:[#allocation6 + $0x74] sm:$0xf]
    %v2277 = vld [vmem:[#allocation6 + $0x78] sm:$0xf]
    %v2278 = vld [vmem:[#allocation6 + $0x7c] sm:$0xf]
    %v2279 = vld [vmem:[%s6] sm:$0x1]
    %v2281 = vlaneseq
    %v2282 = vshrl.u32 %v2281, 7
    %v2283 = vsub.s32 0, %v2282
    %v2284 = vrot.slane %v2279, %v2283
    %v2318 = vunpack.c.l.b16 %v2247
    %v2319 = vunpack.c.l.b16 %v2248
    %v2320 = vunpack.c.l.b16 %v2249
    %v2321 = vunpack.c.l.b16 %v2250
    %v2322 = vunpack.c.l.b16 %v2251
    %v2323 = vunpack.c.l.b16 %v2252
    %v2324 = vunpack.c.l.b16 %v2253
    %v2325 = vunpack.c.l.b16 %v2254
    %v2326 = vunpack.c.l.b16 %v2255
    %v2327 = vunpack.c.l.b16 %v2256
    %v2328 = vunpack.c.l.b16 %v2257
    %v2329 = vunpack.c.l.b16 %v2258
    %v2330 = vunpack.c.l.b16 %v2259
    %v2331 = vunpack.c.l.b16 %v2260
    %v2332 = vunpack.c.l.b16 %v2261
    %v2333 = vunpack.c.l.b16 %v2262
    %v2334 = vunpack.c.l.b16 %v2263
    %v2335 = vunpack.c.l.b16 %v2264
    %v2336 = vunpack.c.l.b16 %v2265
    %v2337 = vunpack.c.l.b16 %v2266
    %v2338 = vunpack.c.l.b16 %v2267
    %v2339 = vunpack.c.l.b16 %v2268
    %v2340 = vunpack.c.l.b16 %v2269
    %v2341 = vunpack.c.l.b16 %v2270
    %v2342 = vunpack.c.l.b16 %v2271
    %v2343 = vunpack.c.l.b16 %v2272
    %v2344 = vunpack.c.l.b16 %v2273
    %v2345 = vunpack.c.l.b16 %v2274
    %v2346 = vunpack.c.l.b16 %v2275
    %v2347 = vunpack.c.l.b16 %v2276
    %v2348 = vunpack.c.l.b16 %v2277
    %v2349 = vunpack.c.l.b16 %v2278
    %v2350 = vpack.c.b16 %v2319, %v2318
    %v2351 = vpack.c.b16 %v2321, %v2320
    %v2352 = vpack.c.b16 %v2323, %v2322
    %v2353 = vpack.c.b16 %v2325, %v2324
    %v2354 = vpack.c.b16 %v2327, %v2326
    %v2355 = vpack.c.b16 %v2329, %v2328
    %v2356 = vpack.c.b16 %v2331, %v2330
    %v2357 = vpack.c.b16 %v2333, %v2332
    %v2358 = vpack.c.b16 %v2335, %v2334
    %v2359 = vpack.c.b16 %v2337, %v2336
    %v2360 = vpack.c.b16 %v2339, %v2338
    %v2361 = vpack.c.b16 %v2341, %v2340
    %v2362 = vpack.c.b16 %v2343, %v2342
    %v2363 = vpack.c.b16 %v2345, %v2344
    %v2364 = vpack.c.b16 %v2347, %v2346
    %v2365 = vpack.c.b16 %v2349, %v2348
    %2382 = vmatprep.subr.bf16.mxu0 0
    %2383 = vmatpush1.bf16.msra.mxu0 %v2357
    %2384 = vmatprep.subr.bf16.mxu0 0
    %2385 = vmatpush1.bf16.msra.mxu0 %v2356
    %2386 = vmatprep.subr.bf16.mxu0 0
    %2387 = vmatpush1.bf16.msra.mxu0 %v2355
    %2388 = vmatprep.subr.bf16.mxu0 0
    %2389 = vmatpush1.bf16.msra.mxu0 %v2354
    %2390 = vmatprep.subr.bf16.mxu0 0
    %2391 = vmatpush1.bf16.msra.mxu0 %v2353
    %2392 = vmatprep.subr.bf16.mxu0 0
    %2393 = vmatpush1.bf16.msra.mxu0 %v2352
    %2394 = vmatprep.subr.bf16.mxu0 0
    %2395 = vmatpush1.bf16.msra.mxu0 %v2351
    %2396 = vmatprep.subr.bf16.mxu0 0
    %2397 = vmatpush1.bf16.msra.mxu0 %v2350
    %2398 = vmatprep.subr.bf16.mxu0 0
    %2399 = vmatpush2.bf16.msra.mxu0 %v2365
    %2400 = vmatprep.subr.bf16.mxu0 0
    %2401 = vmatpush2.bf16.msra.mxu0 %v2364
    %2402 = vmatprep.subr.bf16.mxu0 0
    %2403 = vmatpush2.bf16.msra.mxu0 %v2363
    %2404 = vmatprep.subr.bf16.mxu0 0
    %2405 = vmatpush2.bf16.msra.mxu0 %v2362
    %2406 = vmatprep.subr.bf16.mxu0 0
    %2407 = vmatpush2.bf16.msra.mxu0 %v2361
    %2408 = vmatprep.subr.bf16.mxu0 0
    %2409 = vmatpush2.bf16.msra.mxu0 %v2360
    %2410 = vmatprep.subr.bf16.mxu0 0
    %2411 = vmatpush2.bf16.msra.mxu0 %v2359
    %2412 = vmatprep.subr.bf16.mxu0 0
    %2413 = vmatpush2.bf16.msra.mxu0 %v2358
    %2414 = vmatprep.mubr.bf16.mxu0 %v2200
    %2415 = vmatmul.mubr.bf16.gmra.mxu0 %v2199
    %v2416 = vpop.f32.mrf.mxu0
    %v2417 = vadd.f32 %v2284, %v2416
    %v2418 = vpop.f32.mrf.mxu0
    %v2419 = vpop.f32.mrf.mxu0
    %v2420 = vadd.f32 %v2284, %v2419
    %v2421 = vpop.f32.mrf.mxu0
    %2422 = vmatprep.mubr.bf16.mxu0 %v2202
    %2423 = vmatmul.mubr.bf16.gmra.mxu0 %v2201
    %v2424 = vpop.f32.mrf.mxu0
    %v2425 = vadd.f32 %v2284, %v2424
    %v2426 = vpop.f32.mrf.mxu0
    %v2427 = vpop.f32.mrf.mxu0
    %v2428 = vadd.f32 %v2284, %v2427
    %v2429 = vpop.f32.mrf.mxu0
    %2430 = vmatprep.mubr.bf16.mxu0 %v2204
    %2431 = vmatmul.mubr.bf16.gmra.mxu0 %v2203
    %v2432 = vpop.f32.mrf.mxu0
    %v2433 = vadd.f32 %v2284, %v2432
    %v2434 = vpop.f32.mrf.mxu0
    %v2435 = vpop.f32.mrf.mxu0
    %v2436 = vadd.f32 %v2284, %v2435
    %v2437 = vpop.f32.mrf.mxu0
    %2438 = vmatprep.mubr.bf16.mxu0 %v2206
    %2439 = vmatmul.mubr.bf16.gmra.mxu0 %v2205
    %v2440 = vpop.f32.mrf.mxu0
    %v2441 = vadd.f32 %v2284, %v2440
    %v2442 = vpop.f32.mrf.mxu0
    %v2443 = vpop.f32.mrf.mxu0
    %v2444 = vadd.f32 %v2284, %v2443
    %v2445 = vpop.f32.mrf.mxu0
    %2446 = vmatprep.mubr.bf16.mxu0 %v2208
    %2447 = vmatmul.mubr.bf16.gmra.mxu0 %v2207
    %v2448 = vpop.f32.mrf.mxu0
    %v2449 = vadd.f32 %v2284, %v2448
    %v2450 = vpop.f32.mrf.mxu0
    %v2451 = vpop.f32.mrf.mxu0
    %v2452 = vadd.f32 %v2284, %v2451
    %v2453 = vpop.f32.mrf.mxu0
    %2454 = vmatprep.mubr.bf16.mxu0 %v2210
    %2455 = vmatmul.mubr.bf16.gmra.mxu0 %v2209
    %v2456 = vpop.f32.mrf.mxu0
    %v2457 = vadd.f32 %v2284, %v2456
    %v2458 = vpop.f32.mrf.mxu0
    %v2459 = vpop.f32.mrf.mxu0
    %v2460 = vadd.f32 %v2284, %v2459
    %v2461 = vpop.f32.mrf.mxu0
    %2462 = vmatprep.mubr.bf16.mxu0 %v2212
    %2463 = vmatmul.mubr.bf16.gmra.mxu0 %v2211
    %v2464 = vpop.f32.mrf.mxu0
    %v2465 = vadd.f32 %v2284, %v2464
    %v2466 = vpop.f32.mrf.mxu0
    %v2467 = vpop.f32.mrf.mxu0
    %v2468 = vadd.f32 %v2284, %v2467
    %v2469 = vpop.f32.mrf.mxu0
    %2470 = vmatprep.mubr.bf16.mxu0 %v2214
    %2471 = vmatmul.mubr.bf16.gmra.mxu0 %v2213
    %v2472 = vpop.f32.mrf.mxu0
    %v2473 = vadd.f32 %v2284, %v2472
    %v2474 = vpop.f32.mrf.mxu0
    %v2475 = vpop.f32.mrf.mxu0
    %v2476 = vadd.f32 %v2284, %v2475
    %v2477 = vpop.f32.mrf.mxu0
    %2478 = vmatprep.mubr.bf16.mxu0 %v2216
    %2479 = vmatmul.mubr.bf16.gmra.mxu0 %v2215
    %v2480 = vpop.f32.mrf.mxu0
    %v2481 = vadd.f32 %v2284, %v2480
    %v2482 = vpop.f32.mrf.mxu0
    %v2483 = vpop.f32.mrf.mxu0
    %v2484 = vadd.f32 %v2284, %v2483
    %v2485 = vpop.f32.mrf.mxu0
    %2486 = vmatprep.mubr.bf16.mxu0 %v2218
    %2487 = vmatmul.mubr.bf16.gmra.mxu0 %v2217
    %v2488 = vpop.f32.mrf.mxu0
    %v2489 = vadd.f32 %v2284, %v2488
    %v2490 = vpop.f32.mrf.mxu0
    %v2491 = vpop.f32.mrf.mxu0
    %v2492 = vadd.f32 %v2284, %v2491
    %v2493 = vpop.f32.mrf.mxu0
    %2494 = vmatprep.mubr.bf16.mxu0 %v2220
    %2495 = vmatmul.mubr.bf16.gmra.mxu0 %v2219
    %v2496 = vpop.f32.mrf.mxu0
    %v2497 = vadd.f32 %v2284, %v2496
    %v2498 = vpop.f32.mrf.mxu0
    %v2499 = vpop.f32.mrf.mxu0
    %v2500 = vadd.f32 %v2284, %v2499
    %v2501 = vpop.f32.mrf.mxu0
    %2502 = vmatprep.mubr.bf16.mxu0 %v2222
    %2503 = vmatmul.mubr.bf16.gmra.mxu0 %v2221
    %v2504 = vpop.f32.mrf.mxu0
    %v2505 = vadd.f32 %v2284, %v2504
    %v2506 = vpop.f32.mrf.mxu0
    %v2507 = vpop.f32.mrf.mxu0
    %v2508 = vadd.f32 %v2284, %v2507
    %v2509 = vpop.f32.mrf.mxu0
    %2510 = vmatprep.mubr.bf16.mxu0 %v2224
    %2511 = vmatmul.mubr.bf16.gmra.mxu0 %v2223
    %v2512 = vpop.f32.mrf.mxu0
    %v2513 = vadd.f32 %v2284, %v2512
    %v2514 = vpop.f32.mrf.mxu0
    %v2515 = vpop.f32.mrf.mxu0
    %v2516 = vadd.f32 %v2284, %v2515
    %v2517 = vpop.f32.mrf.mxu0
    %2518 = vmatprep.mubr.bf16.mxu0 %v2226
    %2519 = vmatmul.mubr.bf16.gmra.mxu0 %v2225
    %v2520 = vpop.f32.mrf.mxu0
    %v2521 = vadd.f32 %v2284, %v2520
    %v2522 = vpop.f32.mrf.mxu0
    %v2523 = vpop.f32.mrf.mxu0
    %v2524 = vadd.f32 %v2284, %v2523
    %v2525 = vpop.f32.mrf.mxu0
    %2526 = vmatprep.mubr.bf16.mxu0 %v2228
    %2527 = vmatmul.mubr.bf16.gmra.mxu0 %v2227
    %v2528 = vpop.f32.mrf.mxu0
    %v2529 = vadd.f32 %v2284, %v2528
    %v2530 = vpop.f32.mrf.mxu0
    %v2531 = vpop.f32.mrf.mxu0
    %v2532 = vadd.f32 %v2284, %v2531
    %v2533 = vpop.f32.mrf.mxu0
    %2534 = vmatprep.mubr.bf16.mxu0 %v2230
    %2535 = vmatmul.mubr.bf16.gmra.mxu0 %v2229
    %v2536 = vpop.f32.mrf.mxu0
    %v2537 = vadd.f32 %v2284, %v2536
    %v2538 = vpop.f32.mrf.mxu0
    %v2539 = vpop.f32.mrf.mxu0
    %v2540 = vadd.f32 %v2284, %v2539
    %v2541 = vpop.f32.mrf.mxu0
    %2542 = vmatprep.mubr.bf16.mxu0 %v2232
    %2543 = vmatmul.mubr.bf16.gmra.mxu0 %v2231
    %v2544 = vpop.f32.mrf.mxu0
    %v2545 = vadd.f32 %v2284, %v2544
    %v2546 = vpop.f32.mrf.mxu0
    %v2547 = vpop.f32.mrf.mxu0
    %v2548 = vadd.f32 %v2284, %v2547
    %v2549 = vpop.f32.mrf.mxu0
    %2550 = vmatprep.mubr.bf16.mxu0 %v2234
    %2551 = vmatmul.mubr.bf16.gmra.mxu0 %v2233
    %v2552 = vpop.f32.mrf.mxu0
    %v2553 = vadd.f32 %v2284, %v2552
    %v2554 = vpop.f32.mrf.mxu0
    %v2555 = vpop.f32.mrf.mxu0
    %v2556 = vadd.f32 %v2284, %v2555
    %v2557 = vpop.f32.mrf.mxu0
    %2558 = vmatprep.mubr.bf16.mxu0 %v2236
    %2559 = vmatmul.mubr.bf16.gmra.mxu0 %v2235
    %v2560 = vpop.f32.mrf.mxu0
    %v2561 = vadd.f32 %v2284, %v2560
    %v2562 = vpop.f32.mrf.mxu0
    %v2563 = vpop.f32.mrf.mxu0
    %v2564 = vadd.f32 %v2284, %v2563
    %v2565 = vpop.f32.mrf.mxu0
    %2566 = vmatprep.mubr.bf16.mxu0 %v2238
    %2567 = vmatmul.mubr.bf16.gmra.mxu0 %v2237
    %v2568 = vpop.f32.mrf.mxu0
    %v2569 = vadd.f32 %v2284, %v2568
    %v2570 = vpop.f32.mrf.mxu0
    %v2571 = vpop.f32.mrf.mxu0
    %v2572 = vadd.f32 %v2284, %v2571
    %v2573 = vpop.f32.mrf.mxu0
    %2574 = vmatprep.mubr.bf16.mxu0 %v2240
    %2575 = vmatmul.mubr.bf16.gmra.mxu0 %v2239
    %v2576 = vpop.f32.mrf.mxu0
    %v2577 = vadd.f32 %v2284, %v2576
    %v2578 = vpop.f32.mrf.mxu0
    %v2579 = vpop.f32.mrf.mxu0
    %v2580 = vadd.f32 %v2284, %v2579
    %v2581 = vpop.f32.mrf.mxu0
    %2582 = vmatprep.mubr.bf16.mxu0 %v2242
    %2583 = vmatmul.mubr.bf16.gmra.mxu0 %v2241
    %v2584 = vpop.f32.mrf.mxu0
    %v2585 = vadd.f32 %v2284, %v2584
    %v2586 = vpop.f32.mrf.mxu0
    %v2587 = vpop.f32.mrf.mxu0
    %v2588 = vadd.f32 %v2284, %v2587
    %v2589 = vpop.f32.mrf.mxu0
    %2590 = vmatprep.mubr.bf16.mxu0 %v2244
    %2591 = vmatmul.mubr.bf16.gmra.mxu0 %v2243
    %v2592 = vpop.f32.mrf.mxu0
    %v2593 = vadd.f32 %v2284, %v2592
    %v2594 = vpop.f32.mrf.mxu0
    %v2595 = vpop.f32.mrf.mxu0
    %v2596 = vadd.f32 %v2284, %v2595
    %v2597 = vpop.f32.mrf.mxu0
    %2598 = vmatprep.mubr.bf16.mxu0 %v2246
    %2599 = vmatmul.mubr.bf16.gmra.mxu0 %v2245
    %v2600 = vpop.f32.mrf.mxu0
    %v2601 = vadd.f32 %v2284, %v2600
    %v2602 = vpop.f32.mrf.mxu0
    %v2603 = vpop.f32.mrf.mxu0
    %v2604 = vadd.f32 %v2284, %v2603
    %v2605 = vpop.f32.mrf.mxu0
    %2606 = vdwg.mxu0
    %v2607 = vmax.f32 %v2417, 0.0
    %v2608 = vmax.f32 %v2420, 0.0
    %v2609 = vmax.f32 %v2425, 0.0
    %v2610 = vmax.f32 %v2428, 0.0
    %v2611 = vmax.f32 %v2433, 0.0
    %v2612 = vmax.f32 %v2436, 0.0
    %v2613 = vmax.f32 %v2441, 0.0
    %v2614 = vmax.f32 %v2444, 0.0
    %v2615 = vmax.f32 %v2449, 0.0
    %v2616 = vmax.f32 %v2452, 0.0
    %v2617 = vmax.f32 %v2457, 0.0
    %v2618 = vmax.f32 %v2460, 0.0
    %v2619 = vmax.f32 %v2465, 0.0
    %v2620 = vmax.f32 %v2468, 0.0
    %v2621 = vmax.f32 %v2473, 0.0
    %v2622 = vmax.f32 %v2476, 0.0
    %v2623 = vmax.f32 %v2481, 0.0
    %v2624 = vmax.f32 %v2484, 0.0
    %v2625 = vmax.f32 %v2489, 0.0
    %v2626 = vmax.f32 %v2492, 0.0
    %v2627 = vmax.f32 %v2497, 0.0
    %v2628 = vmax.f32 %v2500, 0.0
    %v2629 = vmax.f32 %v2505, 0.0
    %v2630 = vmax.f32 %v2508, 0.0
    %v2631 = vmax.f32 %v2513, 0.0
    %v2632 = vmax.f32 %v2516, 0.0
    %v2633 = vmax.f32 %v2521, 0.0
    %v2634 = vmax.f32 %v2524, 0.0
    %v2635 = vmax.f32 %v2529, 0.0
    %v2636 = vmax.f32 %v2532, 0.0
    %v2637 = vmax.f32 %v2537, 0.0
    %v2638 = vmax.f32 %v2540, 0.0
    %v2639 = vmax.f32 %v2545, 0.0
    %v2640 = vmax.f32 %v2548, 0.0
    %v2641 = vmax.f32 %v2553, 0.0
    %v2642 = vmax.f32 %v2556, 0.0
    %v2643 = vmax.f32 %v2561, 0.0
    %v2644 = vmax.f32 %v2564, 0.0
    %v2645 = vmax.f32 %v2569, 0.0
    %v2646 = vmax.f32 %v2572, 0.0
    %v2647 = vmax.f32 %v2577, 0.0
    %v2648 = vmax.f32 %v2580, 0.0
    %v2649 = vmax.f32 %v2585, 0.0
    %v2650 = vmax.f32 %v2588, 0.0
    %v2651 = vmax.f32 %v2593, 0.0
    %v2652 = vmax.f32 %v2596, 0.0
    %v2653 = vmax.f32 %v2601, 0.0
    %v2654 = vmax.f32 %v2604, 0.0
    %v2655 = vld [vmem:[%s7] sm:$0x1]
    %v2656 = vpack.c.bf16 %v2608, %v2607
    %v2657 = vpack.c.bf16 %v2610, %v2609
    %v2658 = vpack.c.bf16 %v2612, %v2611
    %v2659 = vpack.c.bf16 %v2614, %v2613
    %v2660 = vpack.c.bf16 %v2616, %v2615
    %v2661 = vpack.c.bf16 %v2618, %v2617
    %v2662 = vpack.c.bf16 %v2620, %v2619
    %v2663 = vpack.c.bf16 %v2622, %v2621
    %v2664 = vpack.c.bf16 %v2624, %v2623
    %v2665 = vpack.c.bf16 %v2626, %v2625
    %v2666 = vpack.c.bf16 %v2628, %v2627
    %v2667 = vpack.c.bf16 %v2630, %v2629
    %v2668 = vpack.c.bf16 %v2632, %v2631
    %v2669 = vpack.c.bf16 %v2634, %v2633
    %v2670 = vpack.c.bf16 %v2636, %v2635
    %v2671 = vpack.c.bf16 %v2638, %v2637
    %v2672 = vpack.c.bf16 %v2640, %v2639
    %v2673 = vpack.c.bf16 %v2642, %v2641
    %v2674 = vpack.c.bf16 %v2644, %v2643
    %v2675 = vpack.c.bf16 %v2646, %v2645
    %v2676 = vpack.c.bf16 %v2648, %v2647
    %v2677 = vpack.c.bf16 %v2650, %v2649
    %v2678 = vpack.c.bf16 %v2652, %v2651
    %v2679 = vpack.c.bf16 %v2654, %v2653
    %v2680 = vld [vmem:[#allocation2] sm:$0x1]
    %2682 = vset.pattern.permute.xlu0 0
    %2683 = vperm.xlu0 %2682, %v2680
    %v2684 = vpop.permute.xlu0 %2683
    %v2686 = vlaneseq
    %v2687 = vshrl.u32 %v2686, 7
    %v2688 = vsub.s32 0, %v2687
    %v2689 = vrot.slane %v2684, %v2688
    %2690 = vmatprep.subr.bf16.mxu0 0
    %2691 = vmatpush1.bf16.xpose.msra.mxu0 %v2663
    %2692 = vmatprep.subr.bf16.mxu0 0
    %2693 = vmatpush1.bf16.xpose.msra.mxu0 %v2662
    %2694 = vmatprep.subr.bf16.mxu0 0
    %2695 = vmatpush1.bf16.xpose.msra.mxu0 %v2661
    %2696 = vmatprep.subr.bf16.mxu0 0
    %2697 = vmatpush1.bf16.xpose.msra.mxu0 %v2660
    %2698 = vmatprep.subr.bf16.mxu0 0
    %2699 = vmatpush1.bf16.xpose.msra.mxu0 %v2659
    %2700 = vmatprep.subr.bf16.mxu0 0
    %2701 = vmatpush1.bf16.xpose.msra.mxu0 %v2658
    %2702 = vmatprep.subr.bf16.mxu0 0
    %2703 = vmatpush1.bf16.xpose.msra.mxu0 %v2657
    %2704 = vmatprep.subr.bf16.mxu0 0
    %2705 = vmatpush1.bf16.xpose.msra.mxu0 %v2656
    %2706 = vmatprep.subr.bf16.mxu0 0
    %2707 = vmatpush2.bf16.xpose.msra.mxu0 %v2671
    %2708 = vmatprep.subr.bf16.mxu0 0
    %2709 = vmatpush2.bf16.xpose.msra.mxu0 %v2670
    %2710 = vmatprep.subr.bf16.mxu0 0
    %2711 = vmatpush2.bf16.xpose.msra.mxu0 %v2669
    %2712 = vmatprep.subr.bf16.mxu0 0
    %2713 = vmatpush2.bf16.xpose.msra.mxu0 %v2668
    %2714 = vmatprep.subr.bf16.mxu0 0
    %2715 = vmatpush2.bf16.xpose.msra.mxu0 %v2667
    %2716 = vmatprep.subr.bf16.mxu0 0
    %2717 = vmatpush2.bf16.xpose.msra.mxu0 %v2666
    %2718 = vmatprep.subr.bf16.mxu0 0
    %2719 = vmatpush2.bf16.xpose.msra.mxu0 %v2665
    %2720 = vmatprep.subr.bf16.mxu0 0
    %2721 = vmatpush2.bf16.xpose.msra.mxu0 %v2664
    %2722 = vmatprep.mubr.bf16.mxu0 0
    %2723 = vmatmul.mubr.bf16.gmra.mxu0 %v2655
    %v2724 = vpop.f32.mrf.mxu0
    %v2725 = vadd.f32 %v2689, %v2724
    %v2726 = vpop.f32.mrf.mxu0
    %v2727 = vadd.f32 %v2689, %v2726
    %v2728 = vpop.f32.mrf.mxu0
    %v2729 = vpop.f32.mrf.mxu0
    %2730 = vdwg.mxu0
    %2731 = vmatprep.subr.bf16.mxu0 0
    %2732 = vmatpush1.bf16.xpose.msra.mxu0 %v2679
    %2733 = vmatprep.subr.bf16.mxu0 0
    %2734 = vmatpush1.bf16.xpose.msra.mxu0 %v2678
    %2735 = vmatprep.subr.bf16.mxu0 0
    %2736 = vmatpush1.bf16.xpose.msra.mxu0 %v2677
    %2737 = vmatprep.subr.bf16.mxu0 0
    %2738 = vmatpush1.bf16.xpose.msra.mxu0 %v2676
    %2739 = vmatprep.subr.bf16.mxu0 0
    %2740 = vmatpush1.bf16.xpose.msra.mxu0 %v2675
    %2741 = vmatprep.subr.bf16.mxu0 0
    %2742 = vmatpush1.bf16.xpose.msra.mxu0 %v2674
    %2743 = vmatprep.subr.bf16.mxu0 0
    %2744 = vmatpush1.bf16.xpose.msra.mxu0 %v2673
    %2745 = vmatprep.subr.bf16.mxu0 0
    %2746 = vmatpush1.bf16.xpose.msra.mxu0 %v2672
    %2747 = vmatprep.subr.bf16.mxu0 0
    %2748 = vmatpush2.bf16.xpose.msra.mxu0 0
    %2749 = vmatprep.subr.bf16.mxu0 0
    %2750 = vmatpush2.bf16.xpose.msra.mxu0 0
    %2751 = vmatprep.subr.bf16.mxu0 0
    %2752 = vmatpush2.bf16.xpose.msra.mxu0 0
    %2753 = vmatprep.subr.bf16.mxu0 0
    %2754 = vmatpush2.bf16.xpose.msra.mxu0 0
    %2755 = vmatprep.subr.bf16.mxu0 0
    %2756 = vmatpush2.bf16.xpose.msra.mxu0 0
    %2757 = vmatprep.subr.bf16.mxu0 0
    %2758 = vmatpush2.bf16.xpose.msra.mxu0 0
    %2759 = vmatprep.subr.bf16.mxu0 0
    %2760 = vmatpush2.bf16.xpose.msra.mxu0 0
    %2761 = vmatprep.subr.bf16.mxu0 0
    %2762 = vmatpush2.bf16.xpose.msra.mxu0 0
    %2763 = vmatprep.mubr.bf16.mxu0 0
    %2764 = vmatmul.mubr.bf16.gmra.mxu0 %v2655
    %v2765 = vpop.f32.mrf.mxu0
    %v2766 = vadd.f32 %v2689, %v2765
    %v2767 = vpop.f32.mrf.mxu0
    %v2768 = vpop.f32.mrf.mxu0
    %v2769 = vpop.f32.mrf.mxu0
    %2770 = vdwg.mxu0
    %v2771 = vand.u32 2147483647, %v2725
    %v2772 = vand.u32 2147483647, %v2727
    %v2773 = vand.u32 2147483647, %v2766
    %v2774 = vsub.f32 0.0, %v2771
    %v2775 = vsub.f32 0.0, %v2772
    %v2776 = vsub.f32 0.0, %v2773
    %v2777 = vmul.f32 %v2774, 1.442695
    %v2778 = vpow.pop %v2777
    %v2779 = vmul.f32 %v2775, 1.442695
    %v2780 = vpow.pop %v2779
    %v2781 = vmul.f32 %v2776, 1.442695
    %v2782 = vpow.pop %v2781
    %v2783 = vadd.f32 %v2778, 1.0
    %v2784 = vadd.f32 %v2780, 1.0
    %v2785 = vadd.f32 %v2782, 1.0
    %v2786 = vrcp.pop %v2783
    %v2787 = vrcp.pop %v2784
    %v2788 = vrcp.pop %v2785
    %vm2789 = vcmp.ge.f32.partialorder %v2725, 0.0
    %vm2790 = vcmp.ge.f32.partialorder %v2727, 0.0
    %vm2791 = vcmp.ge.f32.partialorder %v2766, 0.0
    %v2792 = vmul.f32 %v2778, %v2786
    %v2793 = vmul.f32 %v2780, %v2787
    %v2794 = vmul.f32 %v2782, %v2788
    %v2795 = vsel %vm2789, %v2786, %v2792
    %v2796 = vsel %vm2790, %v2787, %v2793
    %v2797 = vsel %vm2791, %v2788, %v2794
    %v2801 = vcombine.low %v2795, %v2796
    %v2803 = vunpack.c.l.s4 1966171168
    %v2804 = vunpack.c.0.s8 %v2803
    %v2805 = vlaneseq
    %v2806 = vshrl.u32 %v2805, 7
    %v2807 = vsub.s32 %v2804, %v2806
    %v2808 = vrot.slane %v2801, %v2807
    %v2810 = vunpack.c.l.s4 1966171168
    %v2811 = vunpack.c.0.s8 %v2810
    %v2812 = vlaneseq
    %v2813 = vshrl.u32 %v2812, 7
    %v2814 = vsub.s32 %v2811, %v2813
    %v2815 = vrot.slane %v2797, %v2814
    %v2816 = vcombine.low %v2808, %v2815
    %v2818 = vunpack.c.l.s4 1966171168
    %v2819 = vunpack.c.0.s8 %v2818
    %v2820 = vlaneseq
    %v2821 = vshrl.u32 %v2820, 7
    %v2822 = vsub.s32 %v2819, %v2821
    %v2823 = vrot.slane %v2816, %v2822
    %v2825 = vlaneseq
    %vm2826 = vcmp.ge.s32.totalorder %v2825, 0
    %vm2827 = vcmp.lt.s32.totalorder %v2825, 384
    %vm2828 = vmand %vm2826, %vm2827
    %2829 = vst.msk [vmem:[#allocation8] sm:$0x7] %vm2828, %v2823
    // Predicated region
    $region46: #{tpu_custom_call.1} parent=1 // pred_check
      _
    $region47: #{tpu_custom_call.1} parent=1 // pred_check_branch
      %2831 = sbr.rel (0) target = $region49
    $region48: #{tpu_custom_call.1} parent=1 // pred_region
      %s2833 = ssub.s32 48, 48
      %2834 = vsyncadd [#allocation5], %s2833
      %s2836 = sshll.u32 [#allocation8], 4
      %s2837 = int_to_ptr.vmem [resolvable:$true] %s2836
      %2839 = dma.vmem_to_hbm [thread:$0]  %s2837, 48, %s9, [#allocation5]
    $region49: #{tpu_custom_call.1} parent=1 // pred_fallthru
      _
    // Predicated region
    $region50: #{tpu_custom_call.1} parent=1 // pred_check
      _
    $region51: #{tpu_custom_call.1} parent=1 // pred_check_branch
      %2841 = sbr.rel (0) target = $region53
    $region52: #{tpu_custom_call.1} parent=1 // pred_region
      %2842 = dma.done [#allocation5], 48
    $region53: #{tpu_custom_call.1} parent=1 // pred_fallthru
      _
    %2843 = vsyncpa [#allocation4], 1
    %2844 = vsyncpa [#allocation7], 1
    %2845 = vsyncpa [#allocation5], 1

</llo_original>
